<compile_context>
chip_gen: v5e
topology: v5e:2x2
jax: 0.10.0
libtpu: 0.0.40
codegen_flags: <defaults>
</compile_context>

<pallas_src>
import functools

import numpy as np
import jax
import jax.numpy as jnp
from jax.experimental import pallas as pl
from jax.experimental.pallas import tpu as pltpu


# ---------------------------------------------------------------------------
# Host-side weight preprocessing (pure layout transforms of the conv / linear
# parameters; exact same math as the per-tap / per-z reference formulation).
# ---------------------------------------------------------------------------
def _band_conv_weight(w9, W, cin, cout, padded_width):
    """Fold the kx (width) taps of a 3x3 'same' conv into 3 banded matrices.

    w9: (9, cin, cout) taps in (ky, kx) order (PyTorch (cout,cin,3,3) flattened).
    Returns (3, Wi*cin, W*cout) with Wi = W+2 if padded_width else W.
    padded_width=True : the input rows carry an explicit w halo (width W+2).
    padded_width=False: the w zero-halo is folded into the band as clipping.
    """
    Wi = W + 2 if padded_width else W
    off = 0 if padded_width else -1
    w = np.asarray(w9, np.float32).reshape(3, 3, cin, cout)
    out = np.zeros((3, Wi * cin, W * cout), np.float32)
    for ky in range(3):
        for kx in range(3):
            for wi in range(W):
                src = wi + kx + off
                if 0 <= src < Wi:
                    out[ky, src * cin:(src + 1) * cin,
                        wi * cout:(wi + 1) * cout] += w[ky, kx]
    return out


def _tile_bias(b, cout, W):
    """(.., cout) bias -> (1, W*cout) lane-dense bias (repeated over w)."""
    return np.tile(np.asarray(b, np.float32).reshape(cout), W).reshape(1, W * cout)


# ---------------------------------------------------------------------------
# Fused kernel: frontend conv + column reduce + transformer + topdown conv
# + classifier, one batch sample per grid step.
# ---------------------------------------------------------------------------
def _pon_fused_kernel(x_ref, scale_ref, w1_ref, b1_ref, w2_ref, b2_ref,
                      w3_ref, b3_ref, w4_ref, b4_ref, out_ref, *, H, W, Z, Cf):
    """x_ref:     (1, H+2, (W+2)*Cin) halo-padded image, lane-dense
       scale_ref: (N,) per-sample calib scale in SMEM (f_y / H^2)
       w1_ref:    (3, (W+2)*Cin, W*Cf)  frontend conv band matrices (bf16)
       b1_ref:    (1, W*Cf)
       w2_ref:    (W*Cf, Z*W*Cf)        transformer block matrix (bf16)
       b2_ref:    (1, Z*W*Cf)
       w3_ref:    (3, W*Cf, W*Cf)       topdown conv band matrices (bf16)
       b3_ref:    (1, W*Cf)
       w4_ref:    (W*Cf, W*K)           block-diagonal 1x1 classifier (bf16)
       b4_ref:    (1, W*K)
       out_ref:   (1, Z, W*K)           lane-dense logits
    """
    n = pl.program_id(0)
    WCf = W * Cf

    # ---- frontend 3x3 conv (+bias, ReLU): 3 banded matmuls, one per ky row
    xd = x_ref[0].astype(jnp.bfloat16)                    # (H+2, (W+2)*Cin)
    feats = jnp.zeros((H, WCf), jnp.float32)
    for ky in range(3):
        feats = feats + jnp.dot(xd[ky:ky + H, :], w1_ref[ky],
                                preferred_element_type=jnp.float32)
    feats = jnp.maximum(feats + b1_ref[...], 0.0)         # (H, W*Cf) lane-dense

    # ---- vertical column reduction (sublane sum) + per-sample calib scale
    col = feats.sum(axis=0, keepdims=True) * scale_ref[n]  # (1, W*Cf)

    # ---- dense BEV transformer: all Z depth bins in one matmul; the row-major
    #      fold of the (1, Z*W*Cf) result is already the (Z, W*Cf) BEV layout.
    bev = jnp.dot(col.astype(jnp.bfloat16), w2_ref[...],
                  preferred_element_type=jnp.float32) + b2_ref[...]
    bev = bev.reshape(Z, WCf)                             # (Z, W*Cf) lane-dense

    # ---- topdown 3x3 conv: z zero-halo rebuilt in VMEM every step, w halo is
    #      folded into the band weights, 3 banded matmuls (one per kz row).
    zrow = jnp.zeros((1, WCf), jnp.float32)
    bev_zpad = jnp.concatenate([zrow, bev, zrow], axis=0).astype(jnp.bfloat16)
    td = jnp.zeros((Z, WCf), jnp.float32)
    for kz in range(3):
        td = td + jnp.dot(bev_zpad[kz:kz + Z, :], w3_ref[kz],
                          preferred_element_type=jnp.float32)
    td = jnp.maximum(td + b3_ref[...], 0.0)               # (Z, W*Cf) lane-dense

    # ---- 1x1 classifier epilogue, stored lane-dense as (Z, W*n_classes)
    logits = jnp.dot(td.astype(jnp.bfloat16), w4_ref[...],
                     preferred_element_type=jnp.float32) + b4_ref[...]
    out_ref[0] = logits.astype(out_ref.dtype)


# ---------------------------------------------------------------------------
# Model
# ---------------------------------------------------------------------------
class PyramidOccupancyNetworkPallas:
    """Mirrors PyramidOccupancyNetwork.forward:
        feature_maps = frontend(image)
        bev_feats    = transformer(feature_maps, calib)
        td_feats     = topdown(bev_feats)
        logits       = classifier(td_feats)
    with all four stages fused into one Pallas kernel (grid over batch).
    """

    def __init__(self, key, in_ch=3, feat_ch=8, bev_depth=8, n_classes=4, width=16):
        self.in_ch, self.feat_ch = in_ch, feat_ch
        self.bev_depth, self.n_classes, self.width = bev_depth, n_classes, width
        ks = jax.random.split(key, 8)
        s = 0.1
        # Base (PyTorch-equivalent) parameters, kept in f32.
        self.w_front = s * jax.random.normal(ks[0], (9, in_ch, feat_ch), jnp.float32)
        self.b_front = s * jax.random.normal(ks[1], (1, feat_ch), jnp.float32)
        self.w_tfm = s * jax.random.normal(ks[2], (bev_depth, feat_ch, feat_ch), jnp.float32)
        self.b_tfm = s * jax.random.normal(ks[3], (bev_depth, 1, feat_ch), jnp.float32)
        self.w_td = s * jax.random.normal(ks[4], (9, feat_ch, feat_ch), jnp.float32)
        self.b_td = s * jax.random.normal(ks[5], (1, feat_ch), jnp.float32)
        self.w_cls = s * jax.random.normal(ks[6], (feat_ch, n_classes), jnp.float32)
        self.b_cls = s * jax.random.normal(ks[7], (1, n_classes), jnp.float32)
        self._build_dense_weights()

    def _build_dense_weights(self):
        """Host-side, one-time layout transforms into lane-dense matmul operands."""
        W, Cin, Cf = self.width, self.in_ch, self.feat_ch
        Z, K = self.bev_depth, self.n_classes
        # frontend conv: bands over an explicitly w-padded image row
        w1 = _band_conv_weight(self.w_front, W, Cin, Cf, padded_width=True)
        b1 = _tile_bias(self.b_front, Cf, W)
        # transformer: all Z depth bins in one (W*Cf, Z*W*Cf) block matrix
        wt = np.asarray(self.w_tfm, np.float32)
        bt = np.asarray(self.b_tfm, np.float32).reshape(Z, Cf)
        w2 = np.zeros((W * Cf, Z * W * Cf), np.float32)
        b2 = np.zeros((1, Z * W * Cf), np.float32)
        for z in range(Z):
            for wi in range(W):
                r0, c0 = wi * Cf, z * W * Cf + wi * Cf
                w2[r0:r0 + Cf, c0:c0 + Cf] = wt[z]
                b2[0, c0:c0 + Cf] = bt[z]
        # topdown conv: bands with the w zero-halo folded in (clipping)
        w3 = _band_conv_weight(self.w_td, W, Cf, Cf, padded_width=False)
        b3 = _tile_bias(self.b_td, Cf, W)
        # 1x1 classifier: block-diagonal (W*Cf, W*K)
        wc = np.asarray(self.w_cls, np.float32)
        w4 = np.zeros((W * Cf, W * K), np.float32)
        for wi in range(W):
            w4[wi * Cf:(wi + 1) * Cf, wi * K:(wi + 1) * K] = wc
        b4 = _tile_bias(self.b_cls, K, W)
        # Matmul operands stored bf16 (MXU); biases stay f32 (VPU epilogue).
        self.w1 = jnp.asarray(w1, jnp.bfloat16)
        self.b1 = jnp.asarray(b1, jnp.float32)
        self.w2 = jnp.asarray(w2, jnp.bfloat16)
        self.b2 = jnp.asarray(b2, jnp.float32)
        self.w3 = jnp.asarray(w3, jnp.bfloat16)
        self.b3 = jnp.asarray(b3, jnp.float32)
        self.w4 = jnp.asarray(w4, jnp.bfloat16)
        self.b4 = jnp.asarray(b4, jnp.float32)

    # --- forward (same composition as the PyTorch module, fully fused) -----
    def __call__(self, image, calib, *args):
        N, H, W, Cin = image.shape
        assert W == self.width and Cin == self.in_ch
        Z, Cf, K = self.bev_depth, self.feat_ch, self.n_classes
        WCf, WK = W * Cf, W * K

        # glue (tiny XLA ops): halo pad + lane-dense fold of the image; fold the
        # column-mean 1/H and the calibration factor f_y/H into one SMEM scalar.
        xpad = jnp.pad(image, ((0, 0), (1, 1), (1, 1), (0, 0)))
        xd = xpad.reshape(N, H + 2, (W + 2) * Cin)
        scale = (calib[:, 1, 1] / jnp.float32(H * H)).astype(jnp.float32)   # (N,)

        kernel = functools.partial(_pon_fused_kernel, H=H, W=W, Z=Z, Cf=Cf)
        out = pl.pallas_call(
            kernel,
            out_shape=jax.ShapeDtypeStruct((N, Z, WK), jnp.float32),
            grid=(N,),
            in_specs=[
                pl.BlockSpec((1, H + 2, (W + 2) * Cin), lambda n: (n, 0, 0)),
                pl.BlockSpec(memory_space=pltpu.MemorySpace.SMEM),
                pl.BlockSpec((3, (W + 2) * Cin, WCf), lambda n: (0, 0, 0)),
                pl.BlockSpec((1, WCf), lambda n: (0, 0)),
                pl.BlockSpec((WCf, Z * WCf), lambda n: (0, 0)),
                pl.BlockSpec((1, Z * WCf), lambda n: (0, 0)),
                pl.BlockSpec((3, WCf, WCf), lambda n: (0, 0, 0)),
                pl.BlockSpec((1, WCf), lambda n: (0, 0)),
                pl.BlockSpec((WCf, WK), lambda n: (0, 0)),
                pl.BlockSpec((1, WK), lambda n: (0, 0)),
            ],
            out_specs=pl.BlockSpec((1, Z, WK), lambda n: (n, 0, 0)),
            compiler_params=pltpu.CompilerParams(
                dimension_semantics=("parallel",)),
        )(xd, scale, self.w1, self.b1, self.w2, self.b2,
          self.w3, self.b3, self.w4, self.b4)

        # lane-dense kernel output -> (N, Z, W, n_classes)
        return out.reshape(N, Z, W, K)


# ---------------------------------------------------------------------------
# Pure-JAX reference (same math; matmul operands quantized to bf16 at the same
# points as the kernel so the comparison is tight).
# ---------------------------------------------------------------------------
def _reference_forward(model, image, calib):
    bf = jnp.bfloat16
    N, H, W, Cin = image.shape
    Z, Cf, K = model.bev_depth, model.feat_ch, model.n_classes
    xp = jnp.pad(image, ((0, 0), (1, 1), (1, 1), (0, 0)))
    feats = jnp.zeros((N, H, W, Cf), jnp.float32)
    for ky in range(3):
        for kx in range(3):
            view = xp[:, ky:ky + H, kx:kx + W, :]
            feats = feats + jnp.einsum('nhwc,cd->nhwd', view.astype(bf),
                                       model.w_front[3 * ky + kx].astype(bf),
                                       preferred_element_type=jnp.float32)
    feats = jnp.maximum(feats + model.b_front.reshape(1, 1, 1, Cf), 0.0)
    scale = (calib[:, 1, 1] / jnp.float32(H * H)).reshape(N, 1, 1)
    col = feats.sum(axis=1) * scale                                    # (N, W, Cf)
    bev = jnp.einsum('nwc,zcd->nzwd', col.astype(bf), model.w_tfm.astype(bf),
                     preferred_element_type=jnp.float32)
    bev = bev + model.b_tfm.reshape(1, Z, 1, Cf)
    bp = jnp.pad(bev, ((0, 0), (1, 1), (1, 1), (0, 0)))
    td = jnp.zeros((N, Z, W, Cf), jnp.float32)
    for kz in range(3):
        for kx in range(3):
            view = bp[:, kz:kz + Z, kx:kx + W, :]
            td = td + jnp.einsum('nzwc,cd->nzwd', view.astype(bf),
                                 model.w_td[3 * kz + kx].astype(bf),
                                 preferred_element_type=jnp.float32)
    td = jnp.maximum(td + model.b_td.reshape(1, 1, 1, Cf), 0.0)
    logits = jnp.einsum('nzwc,ck->nzwk', td.astype(bf), model.w_cls.astype(bf),
                        preferred_element_type=jnp.float32)
    return logits + model.b_cls.reshape(1, 1, 1, K)


# TODO(synk): the reference module's submodules are injected at construction
# time; real FPN / learned-resampling internals are replaced by representative
# conv / dense-transformer blocks with the same dataflow.

if __name__ == "__main__":
    key = jax.random.PRNGKey(0)
    k_img, k_model = jax.random.split(key, 2)

    # image: NHWC (2, 16, 16, 3)  (PyTorch NCHW equivalent: (2, 3, 16, 16))
    image = jax.random.normal(k_img, (2, 16, 16, 3), jnp.float32)
    # calib: (N, 3, 3) camera intrinsics
    intr = jnp.array([[100.0, 0.0, 8.0],
                      [0.0, 120.0, 8.0],
                      [0.0, 0.0, 1.0]], jnp.float32)
    calib = jnp.stack([intr, 1.1 * intr], axis=0)

    model = PyramidOccupancyNetworkPallas(k_model, in_ch=3, feat_ch=8,
                                          bev_depth=8, n_classes=4, width=16)
    logits = model(image, calib)
    jax.block_until_ready(logits)
    assert logits.shape == (2, 8, 16, 4)

    # correctness check against the pure-JAX reference
    ref = _reference_forward(model, image, calib)
    err = float(jnp.max(jnp.abs(logits - ref)))
    assert err < 5e-2, f"max abs error vs reference: {err}"

    print("KERNEL_OK")
</pallas_src>

<mosaic_0001>
module attributes {stable_mosaic.version = 11 : i64} {
  func.func @_pon_fused_kernel(%arg0: i32, %arg1: memref<1x18x54xf32, #tpu.memory_space<vmem>>, %arg2: memref<2xf32, #tpu.memory_space<smem>>, %arg3: memref<3x54x128xbf16, #tpu.memory_space<vmem>>, %arg4: memref<1x128xf32, #tpu.memory_space<vmem>>, %arg5: memref<128x1024xbf16, #tpu.memory_space<vmem>>, %arg6: memref<1x1024xf32, #tpu.memory_space<vmem>>, %arg7: memref<3x128x128xbf16, #tpu.memory_space<vmem>>, %arg8: memref<1x128xf32, #tpu.memory_space<vmem>>, %arg9: memref<128x64xbf16, #tpu.memory_space<vmem>>, %arg10: memref<1x64xf32, #tpu.memory_space<vmem>>, %arg11: memref<1x8x64xf32, #tpu.memory_space<vmem>>) attributes {dimension_semantics = [#tpu.dimension_semantics<parallel>], iteration_bounds = array<i64: 2>, scalar_prefetch = 0 : i64, scratch_operands = 0 : i64, tpu.core_type = #tpu.core_type<tc>, window_params = [{transform_indices = @transform_0, window_bounds = array<i64: 1, 18, 54>}, {transform_indices = @transform_1, window_bounds = array<i64: 2>}, {pipeline_mode = #tpu.pipeline_mode<synchronous>, transform_indices = @transform_2, window_bounds = array<i64: 3, 54, 128>}, {pipeline_mode = #tpu.pipeline_mode<synchronous>, transform_indices = @transform_3, window_bounds = array<i64: 1, 128>}, {pipeline_mode = #tpu.pipeline_mode<synchronous>, transform_indices = @transform_4, window_bounds = array<i64: 128, 1024>}, {pipeline_mode = #tpu.pipeline_mode<synchronous>, transform_indices = @transform_5, window_bounds = array<i64: 1, 1024>}, {pipeline_mode = #tpu.pipeline_mode<synchronous>, transform_indices = @transform_6, window_bounds = array<i64: 3, 128, 128>}, {pipeline_mode = #tpu.pipeline_mode<synchronous>, transform_indices = @transform_7, window_bounds = array<i64: 1, 128>}, {pipeline_mode = #tpu.pipeline_mode<synchronous>, transform_indices = @transform_8, window_bounds = array<i64: 128, 64>}, {pipeline_mode = #tpu.pipeline_mode<synchronous>, transform_indices = @transform_9, window_bounds = array<i64: 1, 64>}, {transform_indices = @transform_10, window_bounds = array<i64: 1, 8, 64>}]} {
    %c0 = arith.constant 0 : index
    %c0_0 = arith.constant 0 : index
    %c0_1 = arith.constant 0 : index
    %0 = vector.load %arg1[%c0, %c0_0, %c0_1] : memref<1x18x54xf32, #tpu.memory_space<vmem>>, vector<1x18x54xf32>
    %1 = vector.shape_cast %0 : vector<1x18x54xf32> to vector<18x54xf32>
    %2 = arith.truncf %1 : vector<18x54xf32> to vector<18x54xbf16>
    %cst = arith.constant 0.000000e+00 : f32
    %3 = vector.broadcast %cst : f32 to vector<16x128xf32>
    %4 = vector.extract_strided_slice %2 {offsets = [0, 0], sizes = [16, 54], strides = [1, 1]} : vector<18x54xbf16> to vector<16x54xbf16>
    %c0_2 = arith.constant 0 : index
    %c0_3 = arith.constant 0 : index
    %c0_4 = arith.constant 0 : index
    %5 = vector.load %arg3[%c0_2, %c0_3, %c0_4] : memref<3x54x128xbf16, #tpu.memory_space<vmem>>, vector<1x54x128xbf16>
    %6 = vector.shape_cast %5 : vector<1x54x128xbf16> to vector<54x128xbf16>
    %cst_5 = arith.constant dense<0.000000e+00> : vector<16x128xf32>
    %7 = tpu.matmul %4, %6, %cst_5 {dimension_numbers = #tpu.dot_dimension_numbers<[1], [0], [0], [1], [0, 0, 1, 1], [], []>} : vector<16x54xbf16>, vector<54x128xbf16>, vector<16x128xf32> -> vector<16x128xf32>
    %8 = arith.addf %3, %7 : vector<16x128xf32>
    %9 = vector.extract_strided_slice %2 {offsets = [1, 0], sizes = [16, 54], strides = [1, 1]} : vector<18x54xbf16> to vector<16x54xbf16>
    %c1 = arith.constant 1 : index
    %c0_6 = arith.constant 0 : index
    %c0_7 = arith.constant 0 : index
    %10 = vector.load %arg3[%c1, %c0_6, %c0_7] : memref<3x54x128xbf16, #tpu.memory_space<vmem>>, vector<1x54x128xbf16>
    %11 = vector.shape_cast %10 : vector<1x54x128xbf16> to vector<54x128xbf16>
    %cst_8 = arith.constant dense<0.000000e+00> : vector<16x128xf32>
    %12 = tpu.matmul %9, %11, %cst_8 {dimension_numbers = #tpu.dot_dimension_numbers<[1], [0], [0], [1], [0, 0, 1, 1], [], []>} : vector<16x54xbf16>, vector<54x128xbf16>, vector<16x128xf32> -> vector<16x128xf32>
    %13 = arith.addf %8, %12 : vector<16x128xf32>
    %14 = vector.extract_strided_slice %2 {offsets = [2, 0], sizes = [16, 54], strides = [1, 1]} : vector<18x54xbf16> to vector<16x54xbf16>
    %c2 = arith.constant 2 : index
    %c0_9 = arith.constant 0 : index
    %c0_10 = arith.constant 0 : index
    %15 = vector.load %arg3[%c2, %c0_9, %c0_10] : memref<3x54x128xbf16, #tpu.memory_space<vmem>>, vector<1x54x128xbf16>
    %16 = vector.shape_cast %15 : vector<1x54x128xbf16> to vector<54x128xbf16>
    %cst_11 = arith.constant dense<0.000000e+00> : vector<16x128xf32>
    %17 = tpu.matmul %14, %16, %cst_11 {dimension_numbers = #tpu.dot_dimension_numbers<[1], [0], [0], [1], [0, 0, 1, 1], [], []>} : vector<16x54xbf16>, vector<54x128xbf16>, vector<16x128xf32> -> vector<16x128xf32>
    %18 = arith.addf %13, %17 : vector<16x128xf32>
    %c0_12 = arith.constant 0 : index
    %c0_13 = arith.constant 0 : index
    %19 = vector.load %arg4[%c0_12, %c0_13] : memref<1x128xf32, #tpu.memory_space<vmem>>, vector<1x128xf32>
    %20 = vector.broadcast %19 : vector<1x128xf32> to vector<16x128xf32>
    %21 = arith.addf %18, %20 : vector<16x128xf32>
    %cst_14 = arith.constant 0.000000e+00 : f32
    %22 = vector.broadcast %cst_14 : f32 to vector<16x128xf32>
    %23 = arith.maximumf %21, %22 : vector<16x128xf32>
    %cst_15 = arith.constant dense<0.000000e+00> : vector<128xf32>
    %24 = vector.multi_reduction <add>, %23, %cst_15 [0] : vector<16x128xf32> to vector<128xf32>
    %25 = vector.shape_cast %24 : vector<128xf32> to vector<1x128xf32>
    %26 = arith.index_cast %arg0 : i32 to index
    %27 = memref.load %arg2[%26] : memref<2xf32, #tpu.memory_space<smem>>
    %28 = vector.broadcast %27 : f32 to vector<1x128xf32>
    %29 = arith.mulf %25, %28 : vector<1x128xf32>
    %30 = arith.truncf %29 : vector<1x128xf32> to vector<1x128xbf16>
    %c0_16 = arith.constant 0 : index
    %c0_17 = arith.constant 0 : index
    %31 = vector.load %arg5[%c0_16, %c0_17] : memref<128x1024xbf16, #tpu.memory_space<vmem>>, vector<128x1024xbf16>
    %cst_18 = arith.constant dense<0.000000e+00> : vector<1x1024xf32>
    %32 = tpu.matmul %30, %31, %cst_18 {dimension_numbers = #tpu.dot_dimension_numbers<[1], [0], [0], [1], [0, 0, 1, 1], [], []>} : vector<1x128xbf16>, vector<128x1024xbf16>, vector<1x1024xf32> -> vector<1x1024xf32>
    %c0_19 = arith.constant 0 : index
    %c0_20 = arith.constant 0 : index
    %33 = vector.load %arg6[%c0_19, %c0_20] : memref<1x1024xf32, #tpu.memory_space<vmem>>, vector<1x1024xf32>
    %34 = arith.addf %32, %33 : vector<1x1024xf32>
    %35 = vector.shape_cast %34 : vector<1x1024xf32> to vector<8x128xf32>
    %cst_21 = arith.constant 0.000000e+00 : f32
    %36 = vector.broadcast %cst_21 : f32 to vector<1x128xf32>
    %37 = tpu.concatenate %36, %35, %36 in 0 : vector<1x128xf32>, vector<8x128xf32>, vector<1x128xf32> -> vector<10x128xf32>
    %38 = arith.truncf %37 : vector<10x128xf32> to vector<10x128xbf16>
    %cst_22 = arith.constant 0.000000e+00 : f32
    %39 = vector.broadcast %cst_22 : f32 to vector<8x128xf32>
    %40 = vector.extract_strided_slice %38 {offsets = [0, 0], sizes = [8, 128], strides = [1, 1]} : vector<10x128xbf16> to vector<8x128xbf16>
    %c0_23 = arith.constant 0 : index
    %c0_24 = arith.constant 0 : index
    %c0_25 = arith.constant 0 : index
    %41 = vector.load %arg7[%c0_23, %c0_24, %c0_25] : memref<3x128x128xbf16, #tpu.memory_space<vmem>>, vector<1x128x128xbf16>
    %42 = vector.shape_cast %41 : vector<1x128x128xbf16> to vector<128x128xbf16>
    %cst_26 = arith.constant dense<0.000000e+00> : vector<8x128xf32>
    %43 = tpu.matmul %40, %42, %cst_26 {dimension_numbers = #tpu.dot_dimension_numbers<[1], [0], [0], [1], [0, 0, 1, 1], [], []>} : vector<8x128xbf16>, vector<128x128xbf16>, vector<8x128xf32> -> vector<8x128xf32>
    %44 = arith.addf %39, %43 : vector<8x128xf32>
    %45 = vector.extract_strided_slice %38 {offsets = [1, 0], sizes = [8, 128], strides = [1, 1]} : vector<10x128xbf16> to vector<8x128xbf16>
    %c1_27 = arith.constant 1 : index
    %c0_28 = arith.constant 0 : index
    %c0_29 = arith.constant 0 : index
    %46 = vector.load %arg7[%c1_27, %c0_28, %c0_29] : memref<3x128x128xbf16, #tpu.memory_space<vmem>>, vector<1x128x128xbf16>
    %47 = vector.shape_cast %46 : vector<1x128x128xbf16> to vector<128x128xbf16>
    %cst_30 = arith.constant dense<0.000000e+00> : vector<8x128xf32>
    %48 = tpu.matmul %45, %47, %cst_30 {dimension_numbers = #tpu.dot_dimension_numbers<[1], [0], [0], [1], [0, 0, 1, 1], [], []>} : vector<8x128xbf16>, vector<128x128xbf16>, vector<8x128xf32> -> vector<8x128xf32>
    %49 = arith.addf %44, %48 : vector<8x128xf32>
    %50 = vector.extract_strided_slice %38 {offsets = [2, 0], sizes = [8, 128], strides = [1, 1]} : vector<10x128xbf16> to vector<8x128xbf16>
    %c2_31 = arith.constant 2 : index
    %c0_32 = arith.constant 0 : index
    %c0_33 = arith.constant 0 : index
    %51 = vector.load %arg7[%c2_31, %c0_32, %c0_33] : memref<3x128x128xbf16, #tpu.memory_space<vmem>>, vector<1x128x128xbf16>
    %52 = vector.shape_cast %51 : vector<1x128x128xbf16> to vector<128x128xbf16>
    %cst_34 = arith.constant dense<0.000000e+00> : vector<8x128xf32>
    %53 = tpu.matmul %50, %52, %cst_34 {dimension_numbers = #tpu.dot_dimension_numbers<[1], [0], [0], [1], [0, 0, 1, 1], [], []>} : vector<8x128xbf16>, vector<128x128xbf16>, vector<8x128xf32> -> vector<8x128xf32>
    %54 = arith.addf %49, %53 : vector<8x128xf32>
    %c0_35 = arith.constant 0 : index
    %c0_36 = arith.constant 0 : index
    %55 = vector.load %arg8[%c0_35, %c0_36] : memref<1x128xf32, #tpu.memory_space<vmem>>, vector<1x128xf32>
    %56 = vector.broadcast %55 : vector<1x128xf32> to vector<8x128xf32>
    %57 = arith.addf %54, %56 : vector<8x128xf32>
    %cst_37 = arith.constant 0.000000e+00 : f32
    %58 = vector.broadcast %cst_37 : f32 to vector<8x128xf32>
    %59 = arith.maximumf %57, %58 : vector<8x128xf32>
    %60 = arith.truncf %59 : vector<8x128xf32> to vector<8x128xbf16>
    %c0_38 = arith.constant 0 : index
    %c0_39 = arith.constant 0 : index
    %61 = vector.load %arg9[%c0_38, %c0_39] : memref<128x64xbf16, #tpu.memory_space<vmem>>, vector<128x64xbf16>
    %cst_40 = arith.constant dense<0.000000e+00> : vector<8x64xf32>
    %62 = tpu.matmul %60, %61, %cst_40 {dimension_numbers = #tpu.dot_dimension_numbers<[1], [0], [0], [1], [0, 0, 1, 1], [], []>} : vector<8x128xbf16>, vector<128x64xbf16>, vector<8x64xf32> -> vector<8x64xf32>
    %c0_41 = arith.constant 0 : index
    %c0_42 = arith.constant 0 : index
    %63 = vector.load %arg10[%c0_41, %c0_42] : memref<1x64xf32, #tpu.memory_space<vmem>>, vector<1x64xf32>
    %64 = vector.broadcast %63 : vector<1x64xf32> to vector<8x64xf32>
    %65 = arith.addf %62, %64 : vector<8x64xf32>
    %c0_43 = arith.constant 0 : index
    %c0_44 = arith.constant 0 : index
    %c0_45 = arith.constant 0 : index
    %66 = vector.load %arg11[%c0_43, %c0_44, %c0_45] : memref<1x8x64xf32, #tpu.memory_space<vmem>>, vector<1x8x64xf32>
    %67 = vector.shape_cast %66 : vector<1x8x64xf32> to vector<8x64xf32>
    %68 = vector.shape_cast %65 : vector<8x64xf32> to vector<1x8x64xf32>
    tpu.vector_store %arg11[%c0_43, %c0_44, %c0_45], %68 {strides = array<i32>} : memref<1x8x64xf32, #tpu.memory_space<vmem>>, vector<1x8x64xf32>,
    return
  }
  func.func @transform_0(%arg0: i32) -> (i32, i32, i32) {
    %c0_i32 = arith.constant 0 : i32
    %c0_i32_0 = arith.constant 0 : i32
    %c0_i32_1 = arith.constant 0 : i32
    return %arg0, %c0_i32, %c0_i32_0 : i32, i32, i32
  }
  func.func @transform_1(%arg0: i32) -> i32 {
    %c0_i32 = arith.constant 0 : i32
    %c0_i32_0 = arith.constant 0 : i32
    return %c0_i32 : i32
  }
  func.func @transform_2(%arg0: i32) -> (i32, i32, i32) {
    %c0_i32 = arith.constant 0 : i32
    %c0_i32_0 = arith.constant 0 : i32
    %c0_i32_1 = arith.constant 0 : i32
    %c0_i32_2 = arith.constant 0 : i32
    return %c0_i32, %c0_i32_0, %c0_i32_1 : i32, i32, i32
  }
  func.func @transform_3(%arg0: i32) -> (i32, i32) {
    %c0_i32 = arith.constant 0 : i32
    %c0_i32_0 = arith.constant 0 : i32
    %c0_i32_1 = arith.constant 0 : i32
    return %c0_i32, %c0_i32_0 : i32, i32
  }
  func.func @transform_4(%arg0: i32) -> (i32, i32) {
    %c0_i32 = arith.constant 0 : i32
    %c0_i32_0 = arith.constant 0 : i32
    %c0_i32_1 = arith.constant 0 : i32
    return %c0_i32, %c0_i32_0 : i32, i32
  }
  func.func @transform_5(%arg0: i32) -> (i32, i32) {
    %c0_i32 = arith.constant 0 : i32
    %c0_i32_0 = arith.constant 0 : i32
    %c0_i32_1 = arith.constant 0 : i32
    return %c0_i32, %c0_i32_0 : i32, i32
  }
  func.func @transform_6(%arg0: i32) -> (i32, i32, i32) {
    %c0_i32 = arith.constant 0 : i32
    %c0_i32_0 = arith.constant 0 : i32
    %c0_i32_1 = arith.constant 0 : i32
    %c0_i32_2 = arith.constant 0 : i32
    return %c0_i32, %c0_i32_0, %c0_i32_1 : i32, i32, i32
  }
  func.func @transform_7(%arg0: i32) -> (i32, i32) {
    %c0_i32 = arith.constant 0 : i32
    %c0_i32_0 = arith.constant 0 : i32
    %c0_i32_1 = arith.constant 0 : i32
    return %c0_i32, %c0_i32_0 : i32, i32
  }
  func.func @transform_8(%arg0: i32) -> (i32, i32) {
    %c0_i32 = arith.constant 0 : i32
    %c0_i32_0 = arith.constant 0 : i32
    %c0_i32_1 = arith.constant 0 : i32
    return %c0_i32, %c0_i32_0 : i32, i32
  }
  func.func @transform_9(%arg0: i32) -> (i32, i32) {
    %c0_i32 = arith.constant 0 : i32
    %c0_i32_0 = arith.constant 0 : i32
    %c0_i32_1 = arith.constant 0 : i32
    return %c0_i32, %c0_i32_0 : i32, i32
  }
  func.func @transform_10(%arg0: i32) -> (i32, i32, i32) {
    %c0_i32 = arith.constant 0 : i32
    %c0_i32_0 = arith.constant 0 : i32
    %c0_i32_1 = arith.constant 0 : i32
    return %arg0, %c0_i32, %c0_i32_0 : i32, i32, i32
  }
}

</mosaic_0001>

<llo_original>
// kernel: tpu_custom_call.1
$region0: #{tpu_custom_call.1}
  #allocation0 [shape = 'u32[]', space=smem, size = 0x4, offset = 0x4, fixed_abs, tag = 'smem constant byte address 0x4 - core index']
  #allocation1 [shape = 'u32[72,128]{1,0:T(1,128)}', space=vmem, size = 0x9000, scoped, tag = 'internal scratch']
  %s0 = inlined_call_operand.vmem [shape: f32[2,18,54], index: 0, kind: input, shape index: {}]
  %s1 = inlined_call_operand.vmem [shape: f32[2], index: 1, kind: input, shape index: {}]
  %s2 = inlined_call_operand.vmem [shape: bf16[3,54,128], index: 2, kind: input, shape index: {}]
  %s3 = inlined_call_operand.vmem [shape: f32[1,128], index: 3, kind: input, shape index: {}]
  %s4 = inlined_call_operand.hbm [shape: bf16[128,1024], index: 4, kind: input, shape index: {}]
  %s5 = inlined_call_operand.vmem [shape: f32[1,1024], index: 5, kind: input, shape index: {}]
  %s6 = inlined_call_operand.hbm [shape: bf16[3,128,128], index: 6, kind: input, shape index: {}]
  %s7 = inlined_call_operand.vmem [shape: f32[1,128], index: 7, kind: input, shape index: {}]
  %s8 = inlined_call_operand.vmem [shape: bf16[128,64], index: 8, kind: input, shape index: {}]
  %s9 = inlined_call_operand.vmem [shape: f32[1,64], index: 9, kind: input, shape index: {}]
  %s10 = inlined_call_operand.hbm [shape: f32[2,8,64], index: 10, kind: output, shape index: {}]
  %s11 = sld [smem:[#allocation0]]
  $region85: #{tpu_custom_call.1} parent=0
    _
  %s13 = ssub.s32 1, %s11
  %s14 = scalar_select 0, %s13, %s11
  $region1: #{tpu_custom_call.1} parent=0
    #allocation2 [shape = 'u8[512]{0}', space=smem, size = 0x200, scoped, tag = 'input window, operand 1, single buffered']
    #allocation3 [shape = 's32[2]{0}', space=sflag, size = 0x8, scoped, tag = 'scoped memory for tpu_custom_call.1']
    #allocation4 [shape = 's32[2]{0}', space=sflag, size = 0x8, scoped, tag = 'scoped memory for tpu_custom_call.1']
    #allocation5 [shape = 's32[2]{0}', space=sflag, size = 0x8, scoped, tag = 'scoped memory for tpu_custom_call.1']
    #allocation6 [shape = 'u8[262144]{0}', space=vmem, size = 0x40000, scoped, tag = 'input window, operand 4, single buffered']
    #allocation7 [shape = 'u8[98304]{0}', space=vmem, size = 0x18000, scoped, tag = 'input window, operand 6, single buffered']
    #allocation8 [shape = 's32[1]{0}', space=sflag, size = 0x4, scoped, tag = 'scoped memory for tpu_custom_call.1']
    #allocation9 [shape = 'u8[8192]{0}', space=vmem, size = 0x2000, scoped, tag = 'output window, operand 0']
    %15 = vsyncpa [#allocation5], 0
    %16 = vsyncpa [#allocation3], 0
    %17 = vsyncpa [#allocation8], 0
    %18 = vsyncpa [#allocation4], 0
    %s19 = scalar_lea.sflag [#allocation4], 1
    %20 = vsyncpa %s19, 0
    loop: start=0, step=1, limit=4
    $region2: #{tpu_custom_call.1} parent=1 // loop_pre_header
      _
    $region3: #{tpu_custom_call.1} parent=1 // loop_header
      %s22 = sphi 0, %s26
      %p23 = scmp.ge.s32.totalorder %s22, 4
      %s32 = sphi 0, %s34
      %s35 = sphi 0, %s32
      %s36 = sphi 0, %s35
      %s52 = sphi 0, %s36
      %s56 = sphi 0, %s56
      %s58 = sphi 0, %s56
      %s59 = sphi 0, %s58
      %s73 = sphi 0, %s59
      %s77 = sphi 0, %s77
      %s79 = sphi 0, %s77
      %s80 = sphi 0, %s79
      %s94 = sphi 0, %s80
      %s98 = sphi 0, %s98
      %s100 = sphi 0, %s98
      %s101 = sphi 0, %s100
      %s115 = sphi 0, %s101
      %s119 = sphi 0, %s119
      %s121 = sphi 0, %s119
      %s122 = sphi 0, %s121
      %s136 = sphi 0, %s122
      %s140 = sphi 0, %s140
      %s142 = sphi 0, %s140
      %s143 = sphi 0, %s142
      %s157 = sphi 0, %s143
      %s161 = sphi 0, %s161
      %s163 = sphi 0, %s161
      %s164 = sphi 0, %s163
      %s178 = sphi 0, %s164
      %s182 = sphi 0, %s182
      %s184 = sphi 0, %s182
      %s185 = sphi 0, %s184
      %s199 = sphi 0, %s185
      %s203 = sphi 0, %s203
      %s205 = sphi 0, %s203
      %s206 = sphi 0, %s205
      %s220 = sphi 0, %s206
      %s224 = sphi 0, %s224
      %s226 = sphi 0, %s224
      %s227 = sphi 0, %s226
      %s241 = sphi 0, %s227
      %s247 = sphi 0, %s249
      %s250 = sphi 0, %s247
      %s251 = sphi 0, %s250
      %s267 = sphi 0, %s251
    $region4: #{tpu_custom_call.1} parent=1 // loop_header_branch
      %25 = sbr.rel (%p23) target = $region8
    $region5: #{tpu_custom_call.1} parent=1 // loop_body
      %s27 = ssub.s32 %s22, 1
      %s28 = ssub.s32 %s22, 2
      %s29 = sadd.s32 %s22, 1
      %s30 = ssub.s32 %s22, %s29
      %p31 = scmp.eq.s32.totalorder %s30, 0
      %s33 = sadd.s32 %s32, 1
      %s34 = scalar_select %p31, %s32, %s33
      %p37 = pneg %p31
      %p38 = scmp.eq.s32.totalorder %s22, 1
      %p39 = por %p37, %p38
      %p40 = scmp.ne.s32.totalorder %s32, %s35
      %p41 = scmp.eq.s32.totalorder %s22, 0
      %p42 = por %p40, %p41
      %p43 = scmp.ne.s32.totalorder %s32, %s35
      %p44 = scmp.eq.s32.totalorder %s27, 1
      %p45 = por %p43, %p44
      %p46 = scmp.ne.s32.totalorder %s35, %s36
      %p47 = scmp.eq.s32.totalorder %s27, 0
      %p48 = por %p46, %p47
      %p49 = scmp.ne.s32.totalorder %s35, %s36
      %p50 = scmp.eq.s32.totalorder %s28, 1
      %p51 = por %p49, %p50
      %p53 = scmp.ne.s32.totalorder %s36, %s52
      %p54 = scmp.eq.s32.totalorder %s28, 0
      %p55 = por %p53, %p54
      %s57 = sadd.s32 %s56, 1
      %p60 = scmp.eq.s32.totalorder %s22, 1
      %p61 = scmp.ne.s32.totalorder %s56, %s58
      %p62 = scmp.eq.s32.totalorder %s22, 0
      %p63 = por %p61, %p62
      %p64 = scmp.ne.s32.totalorder %s56, %s58
      %p65 = scmp.eq.s32.totalorder %s27, 1
      %p66 = por %p64, %p65
      %p67 = scmp.ne.s32.totalorder %s58, %s59
      %p68 = scmp.eq.s32.totalorder %s27, 0
      %p69 = por %p67, %p68
      %p70 = scmp.ne.s32.totalorder %s58, %s59
      %p71 = scmp.eq.s32.totalorder %s28, 1
      %p72 = por %p70, %p71
      %p74 = scmp.ne.s32.totalorder %s59, %s73
      %p75 = scmp.eq.s32.totalorder %s28, 0
      %p76 = por %p74, %p75
      %s78 = sadd.s32 %s77, 1
      %p81 = scmp.eq.s32.totalorder %s22, 1
      %p82 = scmp.ne.s32.totalorder %s77, %s79
      %p83 = scmp.eq.s32.totalorder %s22, 0
      %p84 = por %p82, %p83
      %p85 = scmp.ne.s32.totalorder %s77, %s79
      %p86 = scmp.eq.s32.totalorder %s27, 1
      %p87 = por %p85, %p86
      %p88 = scmp.ne.s32.totalorder %s79, %s80
      %p89 = scmp.eq.s32.totalorder %s27, 0
      %p90 = por %p88, %p89
      %p91 = scmp.ne.s32.totalorder %s79, %s80
      %p92 = scmp.eq.s32.totalorder %s28, 1
      %p93 = por %p91, %p92
      %p95 = scmp.ne.s32.totalorder %s80, %s94
      %p96 = scmp.eq.s32.totalorder %s28, 0
      %p97 = por %p95, %p96
      %s99 = sadd.s32 %s98, 1
      %p102 = scmp.eq.s32.totalorder %s22, 1
      %p103 = scmp.ne.s32.totalorder %s98, %s100
      %p104 = scmp.eq.s32.totalorder %s22, 0
      %p105 = por %p103, %p104
      %p106 = scmp.ne.s32.totalorder %s98, %s100
      %p107 = scmp.eq.s32.totalorder %s27, 1
      %p108 = por %p106, %p107
      %p109 = scmp.ne.s32.totalorder %s100, %s101
      %p110 = scmp.eq.s32.totalorder %s27, 0
      %p111 = por %p109, %p110
      %p112 = scmp.ne.s32.totalorder %s100, %s101
      %p113 = scmp.eq.s32.totalorder %s28, 1
      %p114 = por %p112, %p113
      %p116 = scmp.ne.s32.totalorder %s101, %s115
      %p117 = scmp.eq.s32.totalorder %s28, 0
      %p118 = por %p116, %p117
      %s120 = sadd.s32 %s119, 1
      %p123 = scmp.eq.s32.totalorder %s22, 1
      %p124 = scmp.ne.s32.totalorder %s119, %s121
      %p125 = scmp.eq.s32.totalorder %s22, 0
      %p126 = por %p124, %p125
      %p127 = scmp.ne.s32.totalorder %s119, %s121
      %p128 = scmp.eq.s32.totalorder %s27, 1
      %p129 = por %p127, %p128
      %p130 = scmp.ne.s32.totalorder %s121, %s122
      %p131 = scmp.eq.s32.totalorder %s27, 0
      %p132 = por %p130, %p131
      %p133 = scmp.ne.s32.totalorder %s121, %s122
      %p134 = scmp.eq.s32.totalorder %s28, 1
      %p135 = por %p133, %p134
      %p137 = scmp.ne.s32.totalorder %s122, %s136
      %p138 = scmp.eq.s32.totalorder %s28, 0
      %p139 = por %p137, %p138
      %s141 = sadd.s32 %s140, 1
      %p144 = scmp.eq.s32.totalorder %s22, 1
      %p145 = scmp.ne.s32.totalorder %s140, %s142
      %p146 = scmp.eq.s32.totalorder %s22, 0
      %p147 = por %p145, %p146
      %p148 = scmp.ne.s32.totalorder %s140, %s142
      %p149 = scmp.eq.s32.totalorder %s27, 1
      %p150 = por %p148, %p149
      %p151 = scmp.ne.s32.totalorder %s142, %s143
      %p152 = scmp.eq.s32.totalorder %s27, 0
      %p153 = por %p151, %p152
      %p154 = scmp.ne.s32.totalorder %s142, %s143
      %p155 = scmp.eq.s32.totalorder %s28, 1
      %p156 = por %p154, %p155
      %p158 = scmp.ne.s32.totalorder %s143, %s157
      %p159 = scmp.eq.s32.totalorder %s28, 0
      %p160 = por %p158, %p159
      %s162 = sadd.s32 %s161, 1
      %p165 = scmp.eq.s32.totalorder %s22, 1
      %p166 = scmp.ne.s32.totalorder %s161, %s163
      %p167 = scmp.eq.s32.totalorder %s22, 0
      %p168 = por %p166, %p167
      %p169 = scmp.ne.s32.totalorder %s161, %s163
      %p170 = scmp.eq.s32.totalorder %s27, 1
      %p171 = por %p169, %p170
      %p172 = scmp.ne.s32.totalorder %s163, %s164
      %p173 = scmp.eq.s32.totalorder %s27, 0
      %p174 = por %p172, %p173
      %p175 = scmp.ne.s32.totalorder %s163, %s164
      %p176 = scmp.eq.s32.totalorder %s28, 1
      %p177 = por %p175, %p176
      %p179 = scmp.ne.s32.totalorder %s164, %s178
      %p180 = scmp.eq.s32.totalorder %s28, 0
      %p181 = por %p179, %p180
      %s183 = sadd.s32 %s182, 1
      %p186 = scmp.eq.s32.totalorder %s22, 1
      %p187 = scmp.ne.s32.totalorder %s182, %s184
      %p188 = scmp.eq.s32.totalorder %s22, 0
      %p189 = por %p187, %p188
      %p190 = scmp.ne.s32.totalorder %s182, %s184
      %p191 = scmp.eq.s32.totalorder %s27, 1
      %p192 = por %p190, %p191
      %p193 = scmp.ne.s32.totalorder %s184, %s185
      %p194 = scmp.eq.s32.totalorder %s27, 0
      %p195 = por %p193, %p194
      %p196 = scmp.ne.s32.totalorder %s184, %s185
      %p197 = scmp.eq.s32.totalorder %s28, 1
      %p198 = por %p196, %p197
      %p200 = scmp.ne.s32.totalorder %s185, %s199
      %p201 = scmp.eq.s32.totalorder %s28, 0
      %p202 = por %p200, %p201
      %s204 = sadd.s32 %s203, 1
      %p207 = scmp.eq.s32.totalorder %s22, 1
      %p208 = scmp.ne.s32.totalorder %s203, %s205
      %p209 = scmp.eq.s32.totalorder %s22, 0
      %p210 = por %p208, %p209
      %p211 = scmp.ne.s32.totalorder %s203, %s205
      %p212 = scmp.eq.s32.totalorder %s27, 1
      %p213 = por %p211, %p212
      %p214 = scmp.ne.s32.totalorder %s205, %s206
      %p215 = scmp.eq.s32.totalorder %s27, 0
      %p216 = por %p214, %p215
      %p217 = scmp.ne.s32.totalorder %s205, %s206
      %p218 = scmp.eq.s32.totalorder %s28, 1
      %p219 = por %p217, %p218
      %p221 = scmp.ne.s32.totalorder %s206, %s220
      %p222 = scmp.eq.s32.totalorder %s28, 0
      %p223 = por %p221, %p222
      %s225 = sadd.s32 %s224, 1
      %p228 = scmp.eq.s32.totalorder %s22, 1
      %p229 = scmp.ne.s32.totalorder %s224, %s226
      %p230 = scmp.eq.s32.totalorder %s22, 0
      %p231 = por %p229, %p230
      %p232 = scmp.ne.s32.totalorder %s224, %s226
      %p233 = scmp.eq.s32.totalorder %s27, 1
      %p234 = por %p232, %p233
      %p235 = scmp.ne.s32.totalorder %s226, %s227
      %p236 = scmp.eq.s32.totalorder %s27, 0
      %p237 = por %p235, %p236
      %p238 = scmp.ne.s32.totalorder %s226, %s227
      %p239 = scmp.eq.s32.totalorder %s28, 1
      %p240 = por %p238, %p239
      %p242 = scmp.ne.s32.totalorder %s227, %s241
      %p243 = scmp.eq.s32.totalorder %s28, 0
      %p244 = por %p242, %p243
      %s245 = ssub.s32 %s22, %s29
      %p246 = scmp.eq.s32.totalorder %s245, 0
      %s248 = sadd.s32 %s247, 1
      %s249 = scalar_select %p246, %s247, %s248
      %p252 = pneg %p246
      %p253 = scmp.eq.s32.totalorder %s22, 1
      %p254 = por %p252, %p253
      %p255 = scmp.ne.s32.totalorder %s247, %s250
      %p256 = scmp.eq.s32.totalorder %s22, 0
      %p257 = por %p255, %p256
      %p258 = scmp.ne.s32.totalorder %s247, %s250
      %p259 = scmp.eq.s32.totalorder %s27, 1
      %p260 = por %p258, %p259
      %p261 = scmp.ne.s32.totalorder %s250, %s251
      %p262 = scmp.eq.s32.totalorder %s27, 0
      %p263 = por %p261, %p262
      %p264 = scmp.ne.s32.totalorder %s250, %s251
      %p265 = scmp.eq.s32.totalorder %s28, 1
      %p266 = por %p264, %p265
      %p268 = scmp.ne.s32.totalorder %s251, %s267
      %p269 = scmp.eq.s32.totalorder %s28, 0
      %p270 = por %p268, %p269
      %p271 = scmp.le.s32.totalorder 1, %s22
      %p272 = scmp.lt.s32.totalorder %s22, 3
      %p273 = pnand %p271, %p272
      %p274 = pneg %p273
      // Predicated region
      $region9: #{tpu_custom_call.1} parent=5 // pred_check
        _
      $region10: #{tpu_custom_call.1} parent=5 // pred_check_branch
        %276 = sbr.rel (%p273) target = $region12
      $region11: #{tpu_custom_call.1} parent=5 // pred_region
        %s277 = ssub.s32 %s22, 1
        // Predicated region
        $region13: #{tpu_custom_call.1} parent=11 // pred_check
          %p278 = pneg %p69
        $region14: #{tpu_custom_call.1} parent=11 // pred_check_branch
          %280 = sbr.rel (%p278) target = $region16
        $region15: #{tpu_custom_call.1} parent=11 // pred_region
          %282 = vsyncadd [#allocation5], 0
          %s284 = sshll.u32 %s1, 4
          %s285 = int_to_ptr.vmem [resolvable:$true] %s284
          %287 = dma.vmem_to_smem %s285, 16, [#allocation2], [#allocation5]
        $region16: #{tpu_custom_call.1} parent=11 // pred_fallthru
          _
        // Predicated region
        $region17: #{tpu_custom_call.1} parent=11 // pred_check
          %p288 = pneg %p90
        $region18: #{tpu_custom_call.1} parent=11 // pred_check_branch
          %290 = sbr.rel (%p288) target = $region20
        $region19: #{tpu_custom_call.1} parent=11 // pred_region
          _
        $region20: #{tpu_custom_call.1} parent=11 // pred_fallthru
          _
        // Predicated region
        $region21: #{tpu_custom_call.1} parent=11 // pred_check
          %p291 = pneg %p111
        $region22: #{tpu_custom_call.1} parent=11 // pred_check_branch
          %293 = sbr.rel (%p291) target = $region24
        $region23: #{tpu_custom_call.1} parent=11 // pred_region
          _
        $region24: #{tpu_custom_call.1} parent=11 // pred_fallthru
          _
        // Predicated region
        $region25: #{tpu_custom_call.1} parent=11 // pred_check
          %p294 = pneg %p132
        $region26: #{tpu_custom_call.1} parent=11 // pred_check_branch
          %296 = sbr.rel (%p294) target = $region28
        $region27: #{tpu_custom_call.1} parent=11 // pred_region
          %298 = vsyncadd [#allocation3], 0
          %s299 = sshll.u32 %s4, 4
          %s300 = int_to_ptr.hbm [resolvable:$true] %s299
          %s301 = sshll.u32 [#allocation6], 4
          %s302 = int_to_ptr.vmem [resolvable:$true] %s301
          %307 = dma.hbm_to_vmem [thread:$0]  %s300, 8192, %s302, [#allocation3], 512, 512, 32
        $region28: #{tpu_custom_call.1} parent=11 // pred_fallthru
          _
        // Predicated region
        $region29: #{tpu_custom_call.1} parent=11 // pred_check
          %p308 = pneg %p153
        $region30: #{tpu_custom_call.1} parent=11 // pred_check_branch
          %310 = sbr.rel (%p308) target = $region32
        $region31: #{tpu_custom_call.1} parent=11 // pred_region
          _
        $region32: #{tpu_custom_call.1} parent=11 // pred_fallthru
          _
        // Predicated region
        $region33: #{tpu_custom_call.1} parent=11 // pred_check
          %p311 = pneg %p174
        $region34: #{tpu_custom_call.1} parent=11 // pred_check_branch
          %313 = sbr.rel (%p311) target = $region36
        $region35: #{tpu_custom_call.1} parent=11 // pred_region
          %315 = vsyncadd [#allocation8], 0
          %s316 = sshll.u32 %s6, 4
          %s317 = int_to_ptr.hbm [resolvable:$true] %s316
          %s318 = sshll.u32 [#allocation7], 4
          %s319 = int_to_ptr.vmem [resolvable:$true] %s318
          %324 = dma.hbm_to_vmem [thread:$0]  %s317, 3072, %s319, [#allocation8], 64, 64, 4
        $region36: #{tpu_custom_call.1} parent=11 // pred_fallthru
          _
        // Predicated region
        $region37: #{tpu_custom_call.1} parent=11 // pred_check
          %p325 = pneg %p195
        $region38: #{tpu_custom_call.1} parent=11 // pred_check_branch
          %327 = sbr.rel (%p325) target = $region40
        $region39: #{tpu_custom_call.1} parent=11 // pred_region
          _
        $region40: #{tpu_custom_call.1} parent=11 // pred_fallthru
          _
        // Predicated region
        $region41: #{tpu_custom_call.1} parent=11 // pred_check
          %p328 = pneg %p216
        $region42: #{tpu_custom_call.1} parent=11 // pred_check_branch
          %330 = sbr.rel (%p328) target = $region44
        $region43: #{tpu_custom_call.1} parent=11 // pred_region
          _
        $region44: #{tpu_custom_call.1} parent=11 // pred_fallthru
          _
        // Predicated region
        $region45: #{tpu_custom_call.1} parent=11 // pred_check
          %p331 = pneg %p237
        $region46: #{tpu_custom_call.1} parent=11 // pred_check_branch
          %333 = sbr.rel (%p331) target = $region48
        $region47: #{tpu_custom_call.1} parent=11 // pred_region
          _
        $region48: #{tpu_custom_call.1} parent=11 // pred_fallthru
          _
      $region12: #{tpu_custom_call.1} parent=5 // pred_fallthru
        _
      %p334 = scmp.lt.s32.totalorder %s22, 2
      // Predicated region
      $region49: #{tpu_custom_call.1} parent=5 // pred_check
        %p335 = pneg %p334
      $region50: #{tpu_custom_call.1} parent=5 // pred_check_branch
        %337 = sbr.rel (%p335) target = $region52
      $region51: #{tpu_custom_call.1} parent=5 // pred_region
        // Predicated region
        $region53: #{tpu_custom_call.1} parent=51 // pred_check
          %p338 = pneg %p42
        $region54: #{tpu_custom_call.1} parent=51 // pred_check_branch
          %340 = sbr.rel (%p338) target = $region56
        $region55: #{tpu_custom_call.1} parent=51 // pred_region
          %p341 = scmp.lt.s32.totalorder %s22, 1
          %s342 = scalar_select %p341, %s22, 1
          %s343 = smul.addr %s342, 3
          %s344 = smul.addr %s343, 8
          %s345 = scalar_lea.vmem %s0, %s344
        $region56: #{tpu_custom_call.1} parent=51 // pred_fallthru
          _
      $region52: #{tpu_custom_call.1} parent=5 // pred_fallthru
        _
      %p346 = scmp.le.s32.totalorder 1, %s22
      %p347 = scmp.lt.s32.totalorder %s22, 3
      %p348 = pnand %p346, %p347
      %p349 = pneg %p348
      // Predicated region
      $region57: #{tpu_custom_call.1} parent=5 // pred_check
        _
      $region58: #{tpu_custom_call.1} parent=5 // pred_check_branch
        %351 = sbr.rel (%p348) target = $region60
      $region59: #{tpu_custom_call.1} parent=5 // pred_region
        %s352 = ssub.s32 %s22, 1
        // Predicated region
        $region61: #{tpu_custom_call.1} parent=59 // pred_check
          %p353 = pneg %p69
        $region62: #{tpu_custom_call.1} parent=59 // pred_check_branch
          %355 = sbr.rel (%p353) target = $region64
        $region63: #{tpu_custom_call.1} parent=59 // pred_region
          %357 = dma.done [#allocation5], 16
        $region64: #{tpu_custom_call.1} parent=59 // pred_fallthru
          _
        // Predicated region
        $region65: #{tpu_custom_call.1} parent=59 // pred_check
          %p358 = pneg %p132
        $region66: #{tpu_custom_call.1} parent=59 // pred_check_branch
          %360 = sbr.rel (%p358) target = $region68
        $region67: #{tpu_custom_call.1} parent=59 // pred_region
          %362 = dma.done [#allocation3], 8192
        $region68: #{tpu_custom_call.1} parent=59 // pred_fallthru
          _
        // Predicated region
        $region69: #{tpu_custom_call.1} parent=59 // pred_check
          %p363 = pneg %p174
        $region70: #{tpu_custom_call.1} parent=59 // pred_check_branch
          %365 = sbr.rel (%p363) target = $region72
        $region71: #{tpu_custom_call.1} parent=59 // pred_region
          %367 = dma.done [#allocation8], 3072
        $region72: #{tpu_custom_call.1} parent=59 // pred_fallthru
          _
        %368 = sfence
        %p369 = scmp.lt.s32.totalorder %s27, 1
        %s370 = scalar_select %p369, %s27, 1
        %s371 = smul.addr %s370, 3
        %s372 = smul.addr %s371, 8
        %s373 = scalar_lea.vmem %s0, %s372
        %p374 = pneg %p48
        %p375 = pneg %p45
        %p376 = pneg %p69
        %p377 = pneg %p66
        %p378 = pneg %p90
        %p379 = pneg %p87
        %p380 = pneg %p111
        %p381 = pneg %p108
        %p382 = pneg %p132
        %p383 = pneg %p129
        %p384 = pneg %p153
        %p385 = pneg %p150
        %p386 = pneg %p174
        %p387 = pneg %p171
        %p388 = pneg %p195
        %p389 = pneg %p192
        %p390 = pneg %p216
        %p391 = pneg %p213
        %p392 = pneg %p237
        %p393 = pneg %p234
        %p394 = pneg %p263
        %p395 = pneg %p260
        %s396 = sand.u32 %s250, 1
        %s397 = scalar_lea.sflag [#allocation4], %s396
        %s398 = sand.u32 %s250, 1
        %s399 = smul.addr %s398, 8
        %s400 = scalar_lea.vmem [#allocation9], %s399
        %p401 = scmp.lt.s32.totalorder %s27, 1
        %s402 = scalar_select %p401, %s27, 1
        %s403 = smul.addr %s402, 3
        %s404 = smul.addr %s403, 8
        %s405 = scalar_lea.vmem %s0, %s404
        %v407 = vld [vmem:[%s405] sm:$0xff]
        %v408 = vld [vmem:[%s405 + $0x8] sm:$0xff]
        %v409 = vld [vmem:[%s405 + $0x10] sm:$0x3]
        %v410 = vpack.c.bf16 %v407, %v407
        %v411 = vpack.c.bf16 %v408, %v408
        %v412 = vpack.c.bf16 %v409, %v409
        %v413 = vld [vmem:[%s2] sm:$0xf]
        %v414 = vld [vmem:[%s2 + $0x4] sm:$0xf]
        %v415 = vld [vmem:[%s2 + $0x8] sm:$0xf]
        %v416 = vld [vmem:[%s2 + $0xc] sm:$0xf]
        %v417 = vld [vmem:[%s2 + $0x10] sm:$0xf]
        %v418 = vld [vmem:[%s2 + $0x14] sm:$0xf]
        %v419 = vld [vmem:[%s2 + $0x18] sm:$0x7]
        %s420 = scalar_lea.vmem %s2, 28
        %v421 = vld [vmem:[%s420] sm:$0xf]
        %v422 = vld [vmem:[%s420 + $0x4] sm:$0xf]
        %v423 = vld [vmem:[%s420 + $0x8] sm:$0xf]
        %v424 = vld [vmem:[%s420 + $0xc] sm:$0xf]
        %v425 = vld [vmem:[%s420 + $0x10] sm:$0xf]
        %v426 = vld [vmem:[%s420 + $0x14] sm:$0xf]
        %v427 = vld [vmem:[%s420 + $0x18] sm:$0x7]
        %v431 = vunpack.c.l.b16 %v410
        %v432 = vunpack.c.l.b16 %v411
        %v433 = vunpack.c.l.b16 %v412
        %v434 = vpack.c.b16 %v432, %v431
        %v435 = vpack.c.b16 %v433, %v433
        %vm436 = vsmask.f32 7424
        %v438 = vshrl.u32 %v434, 16
        %v440 = vshll.u32 %v434, 16
        %v442 = vrot.slane %v440, 1
        %v443 = vor.u32 %v438, %v442
        %v445 = vshll.u32 %v435, 16
        %v447 = vrot.slane %v445, 1
        %v448 = vsel %vm436, %v443, %v447
        %v456 = vunpack.c.l.b16 %v421
        %v457 = vunpack.c.l.b16 %v422
        %v458 = vunpack.c.l.b16 %v423
        %v459 = vunpack.c.l.b16 %v424
        %v460 = vunpack.c.l.b16 %v425
        %v461 = vunpack.c.l.b16 %v426
        %v462 = vunpack.c.l.b16 %v427
        %v463 = vpack.c.b16 %v457, %v456
        %v464 = vpack.c.b16 %v459, %v458
        %v465 = vpack.c.b16 %v461, %v460
        %v466 = vpack.c.b16 %v462, %v462
        %vm470 = vcmask 441344
        %v472 = vsel %vm470, %v448, 0
        %vm474 = vcmask 1042432
        %v476 = vsel %vm474, %v466, 0
        %478 = vmatpush.bf16.msra.mxu0 0
        %479 = vmatpush.bf16.msra.mxu0 0
        %480 = vmatpush.bf16.msra.mxu0 0
        %481 = vmatpush.bf16.msra.mxu0 0
        %482 = vmatpush.bf16.msra.mxu0 %v476
        %483 = vmatpush.bf16.msra.mxu0 %v465
        %484 = vmatpush.bf16.msra.mxu0 %v464
        %485 = vmatpush.bf16.msra.mxu0 %v463
        %486 = vmatmul.bf16.gmra.mxu0 %v472
        %v487 = vpop.f32.mrf.mxu0
        %v488 = vadd.f32 0.0, %v487
        %v489 = vpop.f32.mrf.mxu0
        %v490 = vadd.f32 0.0, %v489
        %491 = vdwg.mxu0
        %v499 = vunpack.c.l.b16 %v413
        %v500 = vunpack.c.l.b16 %v414
        %v501 = vunpack.c.l.b16 %v415
        %v502 = vunpack.c.l.b16 %v416
        %v503 = vunpack.c.l.b16 %v417
        %v504 = vunpack.c.l.b16 %v418
        %v505 = vunpack.c.l.b16 %v419
        %v506 = vpack.c.b16 %v500, %v499
        %v507 = vpack.c.b16 %v502, %v501
        %v508 = vpack.c.b16 %v504, %v503
        %v509 = vpack.c.b16 %v505, %v505
        %v513 = vsel %vm470, %v434, 0
        %v516 = vsel %vm474, %v509, 0
        %518 = vmatpush.bf16.msra.mxu0 0
        %519 = vmatpush.bf16.msra.mxu0 0
        %520 = vmatpush.bf16.msra.mxu0 0
        %521 = vmatpush.bf16.msra.mxu0 0
        %522 = vmatpush.bf16.msra.mxu0 %v516
        %523 = vmatpush.bf16.msra.mxu0 %v508
        %524 = vmatpush.bf16.msra.mxu0 %v507
        %525 = vmatpush.bf16.msra.mxu0 %v506
        %526 = vmatmul.bf16.gmra.mxu0 %v513
        %v527 = vpop.f32.mrf.mxu0
        %v528 = vadd.f32 %v488, %v527
        %v529 = vpop.f32.mrf.mxu0
        %v530 = vadd.f32 %v490, %v529
        %531 = vdwg.mxu0
        %s532 = scalar_lea.vmem %s2, 56
        %v533 = vld [vmem:[%s532] sm:$0xf]
        %v534 = vld [vmem:[%s532 + $0x4] sm:$0xf]
        %v535 = vld [vmem:[%s532 + $0x8] sm:$0xf]
        %v536 = vld [vmem:[%s532 + $0xc] sm:$0xf]
        %v537 = vld [vmem:[%s532 + $0x10] sm:$0xf]
        %v538 = vld [vmem:[%s532 + $0x14] sm:$0xf]
        %v539 = vld [vmem:[%s532 + $0x18] sm:$0x7]
        %vm540 = vcmask 1046528
        %v541 = vrot.slane %v434, 1
        %v542 = vrot.slane %v435, 1
        %v543 = vsel %vm540, %v541, %v542
        %v551 = vunpack.c.l.b16 %v533
        %v552 = vunpack.c.l.b16 %v534
        %v553 = vunpack.c.l.b16 %v535
        %v554 = vunpack.c.l.b16 %v536
        %v555 = vunpack.c.l.b16 %v537
        %v556 = vunpack.c.l.b16 %v538
        %v557 = vunpack.c.l.b16 %v539
        %v558 = vpack.c.b16 %v552, %v551
        %v559 = vpack.c.b16 %v554, %v553
        %v560 = vpack.c.b16 %v556, %v555
        %v561 = vpack.c.b16 %v557, %v557
        %v566 = vsel %vm470, %v543, 0
        %v569 = vsel %vm474, %v561, 0
        %571 = vmatpush.bf16.msra.mxu0 0
        %572 = vmatpush.bf16.msra.mxu0 0
        %573 = vmatpush.bf16.msra.mxu0 0
        %574 = vmatpush.bf16.msra.mxu0 0
        %575 = vmatpush.bf16.msra.mxu0 %v569
        %576 = vmatpush.bf16.msra.mxu0 %v560
        %577 = vmatpush.bf16.msra.mxu0 %v559
        %578 = vmatpush.bf16.msra.mxu0 %v558
        %579 = vmatmul.bf16.gmra.mxu0 %v566
        %v580 = vpop.f32.mrf.mxu0
        %v581 = vadd.f32 0.0, %v580
        %v582 = vpop.f32.mrf.mxu0
        %v583 = vadd.f32 0.0, %v582
        %584 = vdwg.mxu0
        %v585 = vadd.f32 %v528, %v581
        %v586 = vadd.f32 %v530, %v583
        %v587 = vld [vmem:[%s3] sm:$0x1]
        %v589 = vperm.slane %v587, 0
        %v591 = vadd.f32 %v585, %v589
        %v592 = vadd.f32 %v586, %v589
        %v593 = vmax.f32 %v591, 0.0
        %v594 = vmax.f32 %v592, 0.0
        %v595 = vadd.f32 %v593, %v594
        %v596 = vrot.slane %v595, 4
        %v597 = vadd.f32 %v595, %v596
        %v598 = vrot.slane %v597, 2
        %v599 = vadd.f32 %v597, %v598
        %v600 = vrot.slane %v599, 1
        %v601 = vadd.f32 %v599, %v600
        %s602 = sld [smem:[#allocation2 + %s27]]
        %v603 = vstv %s602
        %v604 = vmul.f32 %v601, %v603
        %v605 = vpack.c.bf16 %v604, %v604
        %v606 = vld [vmem:[#allocation6] sm:$0xff]
        %v607 = vld [vmem:[#allocation6 + $0x8] sm:$0xff]
        %v608 = vld [vmem:[#allocation6 + $0x10] sm:$0xff]
        %v609 = vld [vmem:[#allocation6 + $0x18] sm:$0xff]
        %v610 = vld [vmem:[#allocation6 + $0x20] sm:$0xff]
        %v611 = vld [vmem:[#allocation6 + $0x28] sm:$0xff]
        %v612 = vld [vmem:[#allocation6 + $0x30] sm:$0xff]
        %v613 = vld [vmem:[#allocation6 + $0x38] sm:$0xff]
        %v614 = vld [vmem:[#allocation6 + $0x40] sm:$0xff]
        %v615 = vld [vmem:[#allocation6 + $0x48] sm:$0xff]
        %v616 = vld [vmem:[#allocation6 + $0x50] sm:$0xff]
        %v617 = vld [vmem:[#allocation6 + $0x58] sm:$0xff]
        %v618 = vld [vmem:[#allocation6 + $0x60] sm:$0xff]
        %v619 = vld [vmem:[#allocation6 + $0x68] sm:$0xff]
        %v620 = vld [vmem:[#allocation6 + $0x70] sm:$0xff]
        %v621 = vld [vmem:[#allocation6 + $0x78] sm:$0xff]
        %v622 = vld [vmem:[#allocation6 + $0x80] sm:$0xff]
        %v623 = vld [vmem:[#allocation6 + $0x88] sm:$0xff]
        %v624 = vld [vmem:[#allocation6 + $0x90] sm:$0xff]
        %v625 = vld [vmem:[#allocation6 + $0x98] sm:$0xff]
        %v626 = vld [vmem:[#allocation6 + $0xa0] sm:$0xff]
        %v627 = vld [vmem:[#allocation6 + $0xa8] sm:$0xff]
        %v628 = vld [vmem:[#allocation6 + $0xb0] sm:$0xff]
        %v629 = vld [vmem:[#allocation6 + $0xb8] sm:$0xff]
        %v630 = vld [vmem:[#allocation6 + $0xc0] sm:$0xff]
        %v631 = vld [vmem:[#allocation6 + $0xc8] sm:$0xff]
        %v632 = vld [vmem:[#allocation6 + $0xd0] sm:$0xff]
        %v633 = vld [vmem:[#allocation6 + $0xd8] sm:$0xff]
        %v634 = vld [vmem:[#allocation6 + $0xe0] sm:$0xff]
        %v635 = vld [vmem:[#allocation6 + $0xe8] sm:$0xff]
        %v636 = vld [vmem:[#allocation6 + $0xf0] sm:$0xff]
        %v637 = vld [vmem:[#allocation6 + $0xf8] sm:$0xff]
        %v638 = vld [vmem:[#allocation6 + $0x100] sm:$0xff]
        %v639 = vld [vmem:[#allocation6 + $0x108] sm:$0xff]
        %v640 = vld [vmem:[#allocation6 + $0x110] sm:$0xff]
        %v641 = vld [vmem:[#allocation6 + $0x118] sm:$0xff]
        %v642 = vld [vmem:[#allocation6 + $0x120] sm:$0xff]
        %v643 = vld [vmem:[#allocation6 + $0x128] sm:$0xff]
        %v644 = vld [vmem:[#allocation6 + $0x130] sm:$0xff]
        %v645 = vld [vmem:[#allocation6 + $0x138] sm:$0xff]
        %v646 = vld [vmem:[#allocation6 + $0x140] sm:$0xff]
        %v647 = vld [vmem:[#allocation6 + $0x148] sm:$0xff]
        %v648 = vld [vmem:[#allocation6 + $0x150] sm:$0xff]
        %v649 = vld [vmem:[#allocation6 + $0x158] sm:$0xff]
        %v650 = vld [vmem:[#allocation6 + $0x160] sm:$0xff]
        %v651 = vld [vmem:[#allocation6 + $0x168] sm:$0xff]
        %v652 = vld [vmem:[#allocation6 + $0x170] sm:$0xff]
        %v653 = vld [vmem:[#allocation6 + $0x178] sm:$0xff]
        %v654 = vld [vmem:[#allocation6 + $0x180] sm:$0xff]
        %v655 = vld [vmem:[#allocation6 + $0x188] sm:$0xff]
        %v656 = vld [vmem:[#allocation6 + $0x190] sm:$0xff]
        %v657 = vld [vmem:[#allocation6 + $0x198] sm:$0xff]
        %v658 = vld [vmem:[#allocation6 + $0x1a0] sm:$0xff]
        %v659 = vld [vmem:[#allocation6 + $0x1a8] sm:$0xff]
        %v660 = vld [vmem:[#allocation6 + $0x1b0] sm:$0xff]
        %v661 = vld [vmem:[#allocation6 + $0x1b8] sm:$0xff]
        %v662 = vld [vmem:[#allocation6 + $0x1c0] sm:$0xff]
        %v663 = vld [vmem:[#allocation6 + $0x1c8] sm:$0xff]
        %v664 = vld [vmem:[#allocation6 + $0x1d0] sm:$0xff]
        %v665 = vld [vmem:[#allocation6 + $0x1d8] sm:$0xff]
        %v666 = vld [vmem:[#allocation6 + $0x1e0] sm:$0xff]
        %v667 = vld [vmem:[#allocation6 + $0x1e8] sm:$0xff]
        %v668 = vld [vmem:[#allocation6 + $0x1f0] sm:$0xff]
        %v669 = vld [vmem:[#allocation6 + $0x1f8] sm:$0xff]
        %v670 = vld [vmem:[%s5] sm:$0xff]
        %v735 = vunpack.c.l.b16 %v606
        %v736 = vunpack.c.h.b16 %v606
        %v737 = vunpack.c.l.b16 %v607
        %v738 = vunpack.c.h.b16 %v607
        %v739 = vunpack.c.l.b16 %v608
        %v740 = vunpack.c.h.b16 %v608
        %v741 = vunpack.c.l.b16 %v609
        %v742 = vunpack.c.h.b16 %v609
        %v743 = vunpack.c.l.b16 %v610
        %v744 = vunpack.c.h.b16 %v610
        %v745 = vunpack.c.l.b16 %v611
        %v746 = vunpack.c.h.b16 %v611
        %v747 = vunpack.c.l.b16 %v612
        %v748 = vunpack.c.h.b16 %v612
        %v749 = vunpack.c.l.b16 %v613
        %v750 = vunpack.c.h.b16 %v613
        %v751 = vunpack.c.l.b16 %v614
        %v752 = vunpack.c.h.b16 %v614
        %v753 = vunpack.c.l.b16 %v615
        %v754 = vunpack.c.h.b16 %v615
        %v755 = vunpack.c.l.b16 %v616
        %v756 = vunpack.c.h.b16 %v616
        %v757 = vunpack.c.l.b16 %v617
        %v758 = vunpack.c.h.b16 %v617
        %v759 = vunpack.c.l.b16 %v618
        %v760 = vunpack.c.h.b16 %v618
        %v761 = vunpack.c.l.b16 %v619
        %v762 = vunpack.c.h.b16 %v619
        %v763 = vunpack.c.l.b16 %v620
        %v764 = vunpack.c.h.b16 %v620
        %v765 = vunpack.c.l.b16 %v621
        %v766 = vunpack.c.h.b16 %v621
        %v767 = vunpack.c.l.b16 %v622
        %v768 = vunpack.c.h.b16 %v622
        %v769 = vunpack.c.l.b16 %v623
        %v770 = vunpack.c.h.b16 %v623
        %v771 = vunpack.c.l.b16 %v624
        %v772 = vunpack.c.h.b16 %v624
        %v773 = vunpack.c.l.b16 %v625
        %v774 = vunpack.c.h.b16 %v625
        %v775 = vunpack.c.l.b16 %v626
        %v776 = vunpack.c.h.b16 %v626
        %v777 = vunpack.c.l.b16 %v627
        %v778 = vunpack.c.h.b16 %v627
        %v779 = vunpack.c.l.b16 %v628
        %v780 = vunpack.c.h.b16 %v628
        %v781 = vunpack.c.l.b16 %v629
        %v782 = vunpack.c.h.b16 %v629
        %v783 = vunpack.c.l.b16 %v630
        %v784 = vunpack.c.h.b16 %v630
        %v785 = vunpack.c.l.b16 %v631
        %v786 = vunpack.c.h.b16 %v631
        %v787 = vunpack.c.l.b16 %v632
        %v788 = vunpack.c.h.b16 %v632
        %v789 = vunpack.c.l.b16 %v633
        %v790 = vunpack.c.h.b16 %v633
        %v791 = vunpack.c.l.b16 %v634
        %v792 = vunpack.c.h.b16 %v634
        %v793 = vunpack.c.l.b16 %v635
        %v794 = vunpack.c.h.b16 %v635
        %v795 = vunpack.c.l.b16 %v636
        %v796 = vunpack.c.h.b16 %v636
        %v797 = vunpack.c.l.b16 %v637
        %v798 = vunpack.c.h.b16 %v637
        %v799 = vunpack.c.l.b16 %v638
        %v800 = vunpack.c.h.b16 %v638
        %v801 = vunpack.c.l.b16 %v639
        %v802 = vunpack.c.h.b16 %v639
        %v803 = vunpack.c.l.b16 %v640
        %v804 = vunpack.c.h.b16 %v640
        %v805 = vunpack.c.l.b16 %v641
        %v806 = vunpack.c.h.b16 %v641
        %v807 = vunpack.c.l.b16 %v642
        %v808 = vunpack.c.h.b16 %v642
        %v809 = vunpack.c.l.b16 %v643
        %v810 = vunpack.c.h.b16 %v643
        %v811 = vunpack.c.l.b16 %v644
        %v812 = vunpack.c.h.b16 %v644
        %v813 = vunpack.c.l.b16 %v645
        %v814 = vunpack.c.h.b16 %v645
        %v815 = vunpack.c.l.b16 %v646
        %v816 = vunpack.c.h.b16 %v646
        %v817 = vunpack.c.l.b16 %v647
        %v818 = vunpack.c.h.b16 %v647
        %v819 = vunpack.c.l.b16 %v648
        %v820 = vunpack.c.h.b16 %v648
        %v821 = vunpack.c.l.b16 %v649
        %v822 = vunpack.c.h.b16 %v649
        %v823 = vunpack.c.l.b16 %v650
        %v824 = vunpack.c.h.b16 %v650
        %v825 = vunpack.c.l.b16 %v651
        %v826 = vunpack.c.h.b16 %v651
        %v827 = vunpack.c.l.b16 %v652
        %v828 = vunpack.c.h.b16 %v652
        %v829 = vunpack.c.l.b16 %v653
        %v830 = vunpack.c.h.b16 %v653
        %v831 = vunpack.c.l.b16 %v654
        %v832 = vunpack.c.h.b16 %v654
        %v833 = vunpack.c.l.b16 %v655
        %v834 = vunpack.c.h.b16 %v655
        %v835 = vunpack.c.l.b16 %v656
        %v836 = vunpack.c.h.b16 %v656
        %v837 = vunpack.c.l.b16 %v657
        %v838 = vunpack.c.h.b16 %v657
        %v839 = vunpack.c.l.b16 %v658
        %v840 = vunpack.c.h.b16 %v658
        %v841 = vunpack.c.l.b16 %v659
        %v842 = vunpack.c.h.b16 %v659
        %v843 = vunpack.c.l.b16 %v660
        %v844 = vunpack.c.h.b16 %v660
        %v845 = vunpack.c.l.b16 %v661
        %v846 = vunpack.c.h.b16 %v661
        %v847 = vunpack.c.l.b16 %v662
        %v848 = vunpack.c.h.b16 %v662
        %v849 = vunpack.c.l.b16 %v663
        %v850 = vunpack.c.h.b16 %v663
        %v851 = vunpack.c.l.b16 %v664
        %v852 = vunpack.c.h.b16 %v664
        %v853 = vunpack.c.l.b16 %v665
        %v854 = vunpack.c.h.b16 %v665
        %v855 = vunpack.c.l.b16 %v666
        %v856 = vunpack.c.h.b16 %v666
        %v857 = vunpack.c.l.b16 %v667
        %v858 = vunpack.c.h.b16 %v667
        %v859 = vunpack.c.l.b16 %v668
        %v860 = vunpack.c.h.b16 %v668
        %v861 = vunpack.c.l.b16 %v669
        %v862 = vunpack.c.h.b16 %v669
        %v863 = vpack.c.b16 %v743, %v735
        %v864 = vpack.c.b16 %v744, %v736
        %v865 = vpack.c.b16 %v745, %v737
        %v866 = vpack.c.b16 %v746, %v738
        %v867 = vpack.c.b16 %v747, %v739
        %v868 = vpack.c.b16 %v748, %v740
        %v869 = vpack.c.b16 %v749, %v741
        %v870 = vpack.c.b16 %v750, %v742
        %v871 = vpack.c.b16 %v759, %v751
        %v872 = vpack.c.b16 %v760, %v752
        %v873 = vpack.c.b16 %v761, %v753
        %v874 = vpack.c.b16 %v762, %v754
        %v875 = vpack.c.b16 %v763, %v755
        %v876 = vpack.c.b16 %v764, %v756
        %v877 = vpack.c.b16 %v765, %v757
        %v878 = vpack.c.b16 %v766, %v758
        %v879 = vpack.c.b16 %v775, %v767
        %v880 = vpack.c.b16 %v776, %v768
        %v881 = vpack.c.b16 %v777, %v769
        %v882 = vpack.c.b16 %v778, %v770
        %v883 = vpack.c.b16 %v779, %v771
        %v884 = vpack.c.b16 %v780, %v772
        %v885 = vpack.c.b16 %v781, %v773
        %v886 = vpack.c.b16 %v782, %v774
        %v887 = vpack.c.b16 %v791, %v783
        %v888 = vpack.c.b16 %v792, %v784
        %v889 = vpack.c.b16 %v793, %v785
        %v890 = vpack.c.b16 %v794, %v786
        %v891 = vpack.c.b16 %v795, %v787
        %v892 = vpack.c.b16 %v796, %v788
        %v893 = vpack.c.b16 %v797, %v789
        %v894 = vpack.c.b16 %v798, %v790
        %v895 = vpack.c.b16 %v807, %v799
        %v896 = vpack.c.b16 %v808, %v800
        %v897 = vpack.c.b16 %v809, %v801
        %v898 = vpack.c.b16 %v810, %v802
        %v899 = vpack.c.b16 %v811, %v803
        %v900 = vpack.c.b16 %v812, %v804
        %v901 = vpack.c.b16 %v813, %v805
        %v902 = vpack.c.b16 %v814, %v806
        %v903 = vpack.c.b16 %v823, %v815
        %v904 = vpack.c.b16 %v824, %v816
        %v905 = vpack.c.b16 %v825, %v817
        %v906 = vpack.c.b16 %v826, %v818
        %v907 = vpack.c.b16 %v827, %v819
        %v908 = vpack.c.b16 %v828, %v820
        %v909 = vpack.c.b16 %v829, %v821
        %v910 = vpack.c.b16 %v830, %v822
        %v911 = vpack.c.b16 %v839, %v831
        %v912 = vpack.c.b16 %v840, %v832
        %v913 = vpack.c.b16 %v841, %v833
        %v914 = vpack.c.b16 %v842, %v834
        %v915 = vpack.c.b16 %v843, %v835
        %v916 = vpack.c.b16 %v844, %v836
        %v917 = vpack.c.b16 %v845, %v837
        %v918 = vpack.c.b16 %v846, %v838
        %v919 = vpack.c.b16 %v855, %v847
        %v920 = vpack.c.b16 %v856, %v848
        %v921 = vpack.c.b16 %v857, %v849
        %v922 = vpack.c.b16 %v858, %v850
        %v923 = vpack.c.b16 %v859, %v851
        %v924 = vpack.c.b16 %v860, %v852
        %v925 = vpack.c.b16 %v861, %v853
        %v926 = vpack.c.b16 %v862, %v854
        %v992 = vperm.slane %v670, 0
        %v993 = vperm.slane %v670, 1
        %v994 = vperm.slane %v670, 2
        %v995 = vperm.slane %v670, 3
        %v996 = vperm.slane %v670, 4
        %v997 = vperm.slane %v670, 5
        %v998 = vperm.slane %v670, 6
        %v999 = vperm.slane %v670, 7
        %1008 = vmatpush.bf16.msra.mxu0 %v919
        %1009 = vmatpush.bf16.msra.mxu0 %v911
        %1010 = vmatpush.bf16.msra.mxu0 %v903
        %1011 = vmatpush.bf16.msra.mxu0 %v895
        %1012 = vmatpush.bf16.msra.mxu0 %v887
        %1013 = vmatpush.bf16.msra.mxu0 %v879
        %1014 = vmatpush.bf16.msra.mxu0 %v871
        %1015 = vmatpush.bf16.msra.mxu0 %v863
        %1016 = vmatmul.bf16.gmra.mxu0 %v605
        %v1017 = vpop.f32.mrf.mxu0
        %v1018 = vadd.f32 %v992, %v1017
        %v1019 = vpop.f32.mrf.mxu0
        %1020 = vdwg.mxu0
        %1021 = vmatpush.bf16.msra.mxu0 %v920
        %1022 = vmatpush.bf16.msra.mxu0 %v912
        %1023 = vmatpush.bf16.msra.mxu0 %v904
        %1024 = vmatpush.bf16.msra.mxu0 %v896
        %1025 = vmatpush.bf16.msra.mxu0 %v888
        %1026 = vmatpush.bf16.msra.mxu0 %v880
        %1027 = vmatpush.bf16.msra.mxu0 %v872
        %1028 = vmatpush.bf16.msra.mxu0 %v864
        %1029 = vmatmul.bf16.gmra.mxu0 %v605
        %v1030 = vpop.f32.mrf.mxu0
        %v1031 = vadd.f32 %v993, %v1030
        %v1032 = vpop.f32.mrf.mxu0
        %1033 = vdwg.mxu0
        %1034 = vmatpush.bf16.msra.mxu0 %v921
        %1035 = vmatpush.bf16.msra.mxu0 %v913
        %1036 = vmatpush.bf16.msra.mxu0 %v905
        %1037 = vmatpush.bf16.msra.mxu0 %v897
        %1038 = vmatpush.bf16.msra.mxu0 %v889
        %1039 = vmatpush.bf16.msra.mxu0 %v881
        %1040 = vmatpush.bf16.msra.mxu0 %v873
        %1041 = vmatpush.bf16.msra.mxu0 %v865
        %1042 = vmatmul.bf16.gmra.mxu0 %v605
        %v1043 = vpop.f32.mrf.mxu0
        %v1044 = vadd.f32 %v994, %v1043
        %v1045 = vpop.f32.mrf.mxu0
        %1046 = vdwg.mxu0
        %1047 = vmatpush.bf16.msra.mxu0 %v922
        %1048 = vmatpush.bf16.msra.mxu0 %v914
        %1049 = vmatpush.bf16.msra.mxu0 %v906
        %1050 = vmatpush.bf16.msra.mxu0 %v898
        %1051 = vmatpush.bf16.msra.mxu0 %v890
        %1052 = vmatpush.bf16.msra.mxu0 %v882
        %1053 = vmatpush.bf16.msra.mxu0 %v874
        %1054 = vmatpush.bf16.msra.mxu0 %v866
        %1055 = vmatmul.bf16.gmra.mxu0 %v605
        %v1056 = vpop.f32.mrf.mxu0
        %v1057 = vadd.f32 %v995, %v1056
        %v1058 = vpop.f32.mrf.mxu0
        %1059 = vdwg.mxu0
        %1060 = vmatpush.bf16.msra.mxu0 %v923
        %1061 = vmatpush.bf16.msra.mxu0 %v915
        %1062 = vmatpush.bf16.msra.mxu0 %v907
        %1063 = vmatpush.bf16.msra.mxu0 %v899
        %1064 = vmatpush.bf16.msra.mxu0 %v891
        %1065 = vmatpush.bf16.msra.mxu0 %v883
        %1066 = vmatpush.bf16.msra.mxu0 %v875
        %1067 = vmatpush.bf16.msra.mxu0 %v867
        %1068 = vmatmul.bf16.gmra.mxu0 %v605
        %v1069 = vpop.f32.mrf.mxu0
        %v1070 = vadd.f32 %v996, %v1069
        %v1071 = vpop.f32.mrf.mxu0
        %1072 = vdwg.mxu0
        %1073 = vmatpush.bf16.msra.mxu0 %v924
        %1074 = vmatpush.bf16.msra.mxu0 %v916
        %1075 = vmatpush.bf16.msra.mxu0 %v908
        %1076 = vmatpush.bf16.msra.mxu0 %v900
        %1077 = vmatpush.bf16.msra.mxu0 %v892
        %1078 = vmatpush.bf16.msra.mxu0 %v884
        %1079 = vmatpush.bf16.msra.mxu0 %v876
        %1080 = vmatpush.bf16.msra.mxu0 %v868
        %1081 = vmatmul.bf16.gmra.mxu0 %v605
        %v1082 = vpop.f32.mrf.mxu0
        %v1083 = vadd.f32 %v997, %v1082
        %v1084 = vpop.f32.mrf.mxu0
        %1085 = vdwg.mxu0
        %1086 = vmatpush.bf16.msra.mxu0 %v925
        %1087 = vmatpush.bf16.msra.mxu0 %v917
        %1088 = vmatpush.bf16.msra.mxu0 %v909
        %1089 = vmatpush.bf16.msra.mxu0 %v901
        %1090 = vmatpush.bf16.msra.mxu0 %v893
        %1091 = vmatpush.bf16.msra.mxu0 %v885
        %1092 = vmatpush.bf16.msra.mxu0 %v877
        %1093 = vmatpush.bf16.msra.mxu0 %v869
        %1094 = vmatmul.bf16.gmra.mxu0 %v605
        %v1095 = vpop.f32.mrf.mxu0
        %v1096 = vadd.f32 %v998, %v1095
        %v1097 = vpop.f32.mrf.mxu0
        %1098 = vdwg.mxu0
        %1099 = vmatpush.bf16.msra.mxu0 %v926
        %1100 = vmatpush.bf16.msra.mxu0 %v918
        %1101 = vmatpush.bf16.msra.mxu0 %v910
        %1102 = vmatpush.bf16.msra.mxu0 %v902
        %1103 = vmatpush.bf16.msra.mxu0 %v894
        %1104 = vmatpush.bf16.msra.mxu0 %v886
        %1105 = vmatpush.bf16.msra.mxu0 %v878
        %1106 = vmatpush.bf16.msra.mxu0 %v870
        %1107 = vmatmul.bf16.gmra.mxu0 %v605
        %v1108 = vpop.f32.mrf.mxu0
        %v1109 = vadd.f32 %v999, %v1108
        %v1110 = vpop.f32.mrf.mxu0
        %1111 = vdwg.mxu0
        %v1120 = vrot.slane %v1031, 7
        %v1121 = vrot.slane %v1044, 6
        %v1122 = vrot.slane %v1057, 5
        %v1123 = vrot.slane %v1070, 4
        %v1124 = vrot.slane %v1083, 3
        %v1125 = vrot.slane %v1096, 2
        %v1126 = vrot.slane %v1109, 1
        %vm1127 = vcmask 1040384
        %v1128 = vsel %vm1127, %v1018, %v1120
        %vm1129 = vcmask 1042434
        %v1130 = vsel %vm1129, %v1121, %v1122
        %vm1131 = vcmask 1041408
        %v1132 = vsel %vm1131, %v1128, %v1130
        %vm1133 = vcmask 1044484
        %v1134 = vsel %vm1133, %v1123, %v1124
        %vm1135 = vcmask 1046534
        %v1136 = vsel %vm1135, %v1125, %v1126
        %vm1137 = vcmask 1045508
        %v1138 = vsel %vm1137, %v1134, %v1136
        %vm1139 = vcmask 1043456
        %v1140 = vsel %vm1139, %v1132, %v1138
        %v1141 = vrot.slane %v1140, 7
        %v1143 = vsel %vm1127, 0.0, %v1141
        %v1144 = vsel %vm1127, %v1141, 0.0
        %v1145 = vpack.c.bf16 %v1143, %v1143
        %v1146 = vpack.c.bf16 %v1144, %v1144
        %v1147 = vld [vmem:[#allocation7] sm:$0xf]
        %v1148 = vld [vmem:[#allocation7 + $0x4] sm:$0xf]
        %v1149 = vld [vmem:[#allocation7 + $0x8] sm:$0xf]
        %v1150 = vld [vmem:[#allocation7 + $0xc] sm:$0xf]
        %v1151 = vld [vmem:[#allocation7 + $0x10] sm:$0xf]
        %v1152 = vld [vmem:[#allocation7 + $0x14] sm:$0xf]
        %v1153 = vld [vmem:[#allocation7 + $0x18] sm:$0xf]
        %v1154 = vld [vmem:[#allocation7 + $0x1c] sm:$0xf]
        %v1155 = vld [vmem:[#allocation7 + $0x20] sm:$0xf]
        %v1156 = vld [vmem:[#allocation7 + $0x24] sm:$0xf]
        %v1157 = vld [vmem:[#allocation7 + $0x28] sm:$0xf]
        %v1158 = vld [vmem:[#allocation7 + $0x2c] sm:$0xf]
        %v1159 = vld [vmem:[#allocation7 + $0x30] sm:$0xf]
        %v1160 = vld [vmem:[#allocation7 + $0x34] sm:$0xf]
        %v1161 = vld [vmem:[#allocation7 + $0x38] sm:$0xf]
        %v1162 = vld [vmem:[#allocation7 + $0x3c] sm:$0xf]
        %s1163 = scalar_lea.vmem [#allocation7], 64
        %v1164 = vld [vmem:[%s1163] sm:$0xf]
        %v1165 = vld [vmem:[%s1163 + $0x4] sm:$0xf]
        %v1166 = vld [vmem:[%s1163 + $0x8] sm:$0xf]
        %v1167 = vld [vmem:[%s1163 + $0xc] sm:$0xf]
        %v1168 = vld [vmem:[%s1163 + $0x10] sm:$0xf]
        %v1169 = vld [vmem:[%s1163 + $0x14] sm:$0xf]
        %v1170 = vld [vmem:[%s1163 + $0x18] sm:$0xf]
        %v1171 = vld [vmem:[%s1163 + $0x1c] sm:$0xf]
        %v1172 = vld [vmem:[%s1163 + $0x20] sm:$0xf]
        %v1173 = vld [vmem:[%s1163 + $0x24] sm:$0xf]
        %v1174 = vld [vmem:[%s1163 + $0x28] sm:$0xf]
        %v1175 = vld [vmem:[%s1163 + $0x2c] sm:$0xf]
        %v1176 = vld [vmem:[%s1163 + $0x30] sm:$0xf]
        %v1177 = vld [vmem:[%s1163 + $0x34] sm:$0xf]
        %v1178 = vld [vmem:[%s1163 + $0x38] sm:$0xf]
        %v1179 = vld [vmem:[%s1163 + $0x3c] sm:$0xf]
        %v1182 = vunpack.c.l.b16 %v1145
        %v1183 = vunpack.c.l.b16 %v1146
        %v1184 = vpack.c.b16 %v1183, %v1182
        %v1186 = vshrl.u32 %v1184, 16
        %v1188 = vshll.u32 %v1184, 16
        %v1190 = vrot.slane %v1188, 1
        %v1191 = vor.u32 %v1186, %v1190
        %v1209 = vunpack.c.l.b16 %v1164
        %v1210 = vunpack.c.l.b16 %v1165
        %v1211 = vunpack.c.l.b16 %v1166
        %v1212 = vunpack.c.l.b16 %v1167
        %v1213 = vunpack.c.l.b16 %v1168
        %v1214 = vunpack.c.l.b16 %v1169
        %v1215 = vunpack.c.l.b16 %v1170
        %v1216 = vunpack.c.l.b16 %v1171
        %v1217 = vunpack.c.l.b16 %v1172
        %v1218 = vunpack.c.l.b16 %v1173
        %v1219 = vunpack.c.l.b16 %v1174
        %v1220 = vunpack.c.l.b16 %v1175
        %v1221 = vunpack.c.l.b16 %v1176
        %v1222 = vunpack.c.l.b16 %v1177
        %v1223 = vunpack.c.l.b16 %v1178
        %v1224 = vunpack.c.l.b16 %v1179
        %v1225 = vpack.c.b16 %v1210, %v1209
        %v1226 = vpack.c.b16 %v1212, %v1211
        %v1227 = vpack.c.b16 %v1214, %v1213
        %v1228 = vpack.c.b16 %v1216, %v1215
        %v1229 = vpack.c.b16 %v1218, %v1217
        %v1230 = vpack.c.b16 %v1220, %v1219
        %v1231 = vpack.c.b16 %v1222, %v1221
        %v1232 = vpack.c.b16 %v1224, %v1223
        %1241 = vmatpush.bf16.msra.mxu0 %v1232
        %1242 = vmatpush.bf16.msra.mxu0 %v1231
        %1243 = vmatpush.bf16.msra.mxu0 %v1230
        %1244 = vmatpush.bf16.msra.mxu0 %v1229
        %1245 = vmatpush.bf16.msra.mxu0 %v1228
        %1246 = vmatpush.bf16.msra.mxu0 %v1227
        %1247 = vmatpush.bf16.msra.mxu0 %v1226
        %1248 = vmatpush.bf16.msra.mxu0 %v1225
        %1249 = vmatmul.bf16.gmra.mxu0 %v1191
        %v1250 = vpop.f32.mrf.mxu0
        %v1251 = vadd.f32 0.0, %v1250
        %v1252 = vpop.f32.mrf.mxu0
        %1253 = vdwg.mxu0
        %v1270 = vunpack.c.l.b16 %v1147
        %v1271 = vunpack.c.l.b16 %v1148
        %v1272 = vunpack.c.l.b16 %v1149
        %v1273 = vunpack.c.l.b16 %v1150
        %v1274 = vunpack.c.l.b16 %v1151
        %v1275 = vunpack.c.l.b16 %v1152
        %v1276 = vunpack.c.l.b16 %v1153
        %v1277 = vunpack.c.l.b16 %v1154
        %v1278 = vunpack.c.l.b16 %v1155
        %v1279 = vunpack.c.l.b16 %v1156
        %v1280 = vunpack.c.l.b16 %v1157
        %v1281 = vunpack.c.l.b16 %v1158
        %v1282 = vunpack.c.l.b16 %v1159
        %v1283 = vunpack.c.l.b16 %v1160
        %v1284 = vunpack.c.l.b16 %v1161
        %v1285 = vunpack.c.l.b16 %v1162
        %v1286 = vpack.c.b16 %v1271, %v1270
        %v1287 = vpack.c.b16 %v1273, %v1272
        %v1288 = vpack.c.b16 %v1275, %v1274
        %v1289 = vpack.c.b16 %v1277, %v1276
        %v1290 = vpack.c.b16 %v1279, %v1278
        %v1291 = vpack.c.b16 %v1281, %v1280
        %v1292 = vpack.c.b16 %v1283, %v1282
        %v1293 = vpack.c.b16 %v1285, %v1284
        %1302 = vmatpush.bf16.msra.mxu0 %v1293
        %1303 = vmatpush.bf16.msra.mxu0 %v1292
        %1304 = vmatpush.bf16.msra.mxu0 %v1291
        %1305 = vmatpush.bf16.msra.mxu0 %v1290
        %1306 = vmatpush.bf16.msra.mxu0 %v1289
        %1307 = vmatpush.bf16.msra.mxu0 %v1288
        %1308 = vmatpush.bf16.msra.mxu0 %v1287
        %1309 = vmatpush.bf16.msra.mxu0 %v1286
        %1310 = vmatmul.bf16.gmra.mxu0 %v1145
        %v1311 = vpop.f32.mrf.mxu0
        %v1312 = vadd.f32 %v1251, %v1311
        %v1313 = vpop.f32.mrf.mxu0
        %1314 = vdwg.mxu0
        %s1315 = scalar_lea.vmem [#allocation7], 128
        %v1316 = vld [vmem:[%s1315] sm:$0xf]
        %v1317 = vld [vmem:[%s1315 + $0x4] sm:$0xf]
        %v1318 = vld [vmem:[%s1315 + $0x8] sm:$0xf]
        %v1319 = vld [vmem:[%s1315 + $0xc] sm:$0xf]
        %v1320 = vld [vmem:[%s1315 + $0x10] sm:$0xf]
        %v1321 = vld [vmem:[%s1315 + $0x14] sm:$0xf]
        %v1322 = vld [vmem:[%s1315 + $0x18] sm:$0xf]
        %v1323 = vld [vmem:[%s1315 + $0x1c] sm:$0xf]
        %v1324 = vld [vmem:[%s1315 + $0x20] sm:$0xf]
        %v1325 = vld [vmem:[%s1315 + $0x24] sm:$0xf]
        %v1326 = vld [vmem:[%s1315 + $0x28] sm:$0xf]
        %v1327 = vld [vmem:[%s1315 + $0x2c] sm:$0xf]
        %v1328 = vld [vmem:[%s1315 + $0x30] sm:$0xf]
        %v1329 = vld [vmem:[%s1315 + $0x34] sm:$0xf]
        %v1330 = vld [vmem:[%s1315 + $0x38] sm:$0xf]
        %v1331 = vld [vmem:[%s1315 + $0x3c] sm:$0xf]
        %v1332 = vrot.slane %v1184, 1
        %v1350 = vunpack.c.l.b16 %v1316
        %v1351 = vunpack.c.l.b16 %v1317
        %v1352 = vunpack.c.l.b16 %v1318
        %v1353 = vunpack.c.l.b16 %v1319
        %v1354 = vunpack.c.l.b16 %v1320
        %v1355 = vunpack.c.l.b16 %v1321
        %v1356 = vunpack.c.l.b16 %v1322
        %v1357 = vunpack.c.l.b16 %v1323
        %v1358 = vunpack.c.l.b16 %v1324
        %v1359 = vunpack.c.l.b16 %v1325
        %v1360 = vunpack.c.l.b16 %v1326
        %v1361 = vunpack.c.l.b16 %v1327
        %v1362 = vunpack.c.l.b16 %v1328
        %v1363 = vunpack.c.l.b16 %v1329
        %v1364 = vunpack.c.l.b16 %v1330
        %v1365 = vunpack.c.l.b16 %v1331
        %v1366 = vpack.c.b16 %v1351, %v1350
        %v1367 = vpack.c.b16 %v1353, %v1352
        %v1368 = vpack.c.b16 %v1355, %v1354
        %v1369 = vpack.c.b16 %v1357, %v1356
        %v1370 = vpack.c.b16 %v1359, %v1358
        %v1371 = vpack.c.b16 %v1361, %v1360
        %v1372 = vpack.c.b16 %v1363, %v1362
        %v1373 = vpack.c.b16 %v1365, %v1364
        %1382 = vmatpush.bf16.msra.mxu0 %v1373
        %1383 = vmatpush.bf16.msra.mxu0 %v1372
        %1384 = vmatpush.bf16.msra.mxu0 %v1371
        %1385 = vmatpush.bf16.msra.mxu0 %v1370
        %1386 = vmatpush.bf16.msra.mxu0 %v1369
        %1387 = vmatpush.bf16.msra.mxu0 %v1368
        %1388 = vmatpush.bf16.msra.mxu0 %v1367
        %1389 = vmatpush.bf16.msra.mxu0 %v1366
        %1390 = vmatmul.bf16.gmra.mxu0 %v1332
        %v1391 = vpop.f32.mrf.mxu0
        %v1392 = vadd.f32 0.0, %v1391
        %v1393 = vpop.f32.mrf.mxu0
        %1394 = vdwg.mxu0
        %v1395 = vadd.f32 %v1312, %v1392
        %v1396 = vld [vmem:[%s7] sm:$0x1]
        %v1398 = vperm.slane %v1396, 0
        %v1400 = vadd.f32 %v1395, %v1398
        %v1401 = vmax.f32 %v1400, 0.0
        %v1402 = vpack.c.bf16 %v1401, %v1401
        %v1403 = vld [vmem:[%s8] sm:$0xf]
        %v1404 = vld [vmem:[%s8 + $0x4] sm:$0xf]
        %v1405 = vld [vmem:[%s8 + $0x8] sm:$0xf]
        %v1406 = vld [vmem:[%s8 + $0xc] sm:$0xf]
        %v1407 = vld [vmem:[%s8 + $0x10] sm:$0xf]
        %v1408 = vld [vmem:[%s8 + $0x14] sm:$0xf]
        %v1409 = vld [vmem:[%s8 + $0x18] sm:$0xf]
        %v1410 = vld [vmem:[%s8 + $0x1c] sm:$0xf]
        %v1411 = vld [vmem:[%s8 + $0x20] sm:$0xf]
        %v1412 = vld [vmem:[%s8 + $0x24] sm:$0xf]
        %v1413 = vld [vmem:[%s8 + $0x28] sm:$0xf]
        %v1414 = vld [vmem:[%s8 + $0x2c] sm:$0xf]
        %v1415 = vld [vmem:[%s8 + $0x30] sm:$0xf]
        %v1416 = vld [vmem:[%s8 + $0x34] sm:$0xf]
        %v1417 = vld [vmem:[%s8 + $0x38] sm:$0xf]
        %v1418 = vld [vmem:[%s8 + $0x3c] sm:$0xf]
        %v1419 = vld [vmem:[%s9] sm:$0x1]
        %v1421 = vperm.slane %v1419, 0
        %v1439 = vunpack.c.l.b16 %v1403
        %v1440 = vunpack.c.l.b16 %v1404
        %v1441 = vunpack.c.l.b16 %v1405
        %v1442 = vunpack.c.l.b16 %v1406
        %v1443 = vunpack.c.l.b16 %v1407
        %v1444 = vunpack.c.l.b16 %v1408
        %v1445 = vunpack.c.l.b16 %v1409
        %v1446 = vunpack.c.l.b16 %v1410
        %v1447 = vunpack.c.l.b16 %v1411
        %v1448 = vunpack.c.l.b16 %v1412
        %v1449 = vunpack.c.l.b16 %v1413
        %v1450 = vunpack.c.l.b16 %v1414
        %v1451 = vunpack.c.l.b16 %v1415
        %v1452 = vunpack.c.l.b16 %v1416
        %v1453 = vunpack.c.l.b16 %v1417
        %v1454 = vunpack.c.l.b16 %v1418
        %v1455 = vpack.c.b16 %v1440, %v1439
        %v1456 = vpack.c.b16 %v1442, %v1441
        %v1457 = vpack.c.b16 %v1444, %v1443
        %v1458 = vpack.c.b16 %v1446, %v1445
        %v1459 = vpack.c.b16 %v1448, %v1447
        %v1460 = vpack.c.b16 %v1450, %v1449
        %v1461 = vpack.c.b16 %v1452, %v1451
        %v1462 = vpack.c.b16 %v1454, %v1453
        %1471 = vmatpush.bf16.msra.mxu0 %v1462
        %1472 = vmatpush.bf16.msra.mxu0 %v1461
        %1473 = vmatpush.bf16.msra.mxu0 %v1460
        %1474 = vmatpush.bf16.msra.mxu0 %v1459
        %1475 = vmatpush.bf16.msra.mxu0 %v1458
        %1476 = vmatpush.bf16.msra.mxu0 %v1457
        %1477 = vmatpush.bf16.msra.mxu0 %v1456
        %1478 = vmatpush.bf16.msra.mxu0 %v1455
        %1479 = vmatmul.bf16.gmra.mxu0 %v1402
        %v1480 = vpop.f32.mrf.mxu0
        %v1481 = vadd.f32 %v1421, %v1480
        %v1482 = vpop.f32.mrf.mxu0
        %1483 = vdwg.mxu0
        %vm1484 = vcmask 523264
        %1485 = vst.msk [vmem:[%s400] sm:$0xff] %vm1484, %v1481
        %s1486 = sand.u32 %s250, 1
        %s1487 = scalar_lea.sflag [#allocation4], %s1486
        %s1488 = sand.u32 %s250, 1
        %s1489 = smul.addr %s1488, 8
        %s1490 = scalar_lea.vmem [#allocation9], %s1489
        // Predicated region
        $region73: #{tpu_custom_call.1} parent=59 // pred_check
          %p1491 = pneg %p260
        $region74: #{tpu_custom_call.1} parent=59 // pred_check_branch
          %1493 = sbr.rel (%p1491) target = $region76
        $region75: #{tpu_custom_call.1} parent=59 // pred_region
          %1495 = vsyncadd %s1487, 0
          %s1496 = smul.addr %s27, 8
          %s1497 = scalar_lea.hbm %s10, %s1496
          %s1499 = sshll.u32 %s1490, 4
          %s1500 = int_to_ptr.vmem [resolvable:$true] %s1499
          %s1501 = sshll.u32 %s1497, 4
          %s1502 = int_to_ptr.hbm [resolvable:$true] %s1501
          %1504 = dma.vmem_to_hbm [thread:$0]  %s1500, 128, %s1502, %s1487
        $region76: #{tpu_custom_call.1} parent=59 // pred_fallthru
          _
      $region60: #{tpu_custom_call.1} parent=5 // pred_fallthru
        _
      %p1505 = scmp.le.s32.totalorder 2, %s22
      // Predicated region
      $region77: #{tpu_custom_call.1} parent=5 // pred_check
        %p1506 = pneg %p1505
      $region78: #{tpu_custom_call.1} parent=5 // pred_check_branch
        %1508 = sbr.rel (%p1506) target = $region80
      $region79: #{tpu_custom_call.1} parent=5 // pred_region
        %s1509 = ssub.s32 %s22, 2
        // Predicated region
        $region81: #{tpu_custom_call.1} parent=79 // pred_check
          %p1510 = pneg %p266
        $region82: #{tpu_custom_call.1} parent=79 // pred_check_branch
          %1512 = sbr.rel (%p1510) target = $region84
        $region83: #{tpu_custom_call.1} parent=79 // pred_region
          %s1513 = sand.u32 %s251, 1
          %s1514 = scalar_lea.sflag [#allocation4], %s1513
          %s1515 = sand.u32 %s251, 1
          %s1516 = smul.addr %s1515, 8
          %s1517 = scalar_lea.vmem [#allocation9], %s1516
          %1519 = dma.done %s1514, 128
        $region84: #{tpu_custom_call.1} parent=79 // pred_fallthru
          _
      $region80: #{tpu_custom_call.1} parent=5 // pred_fallthru
        _
    $region6: #{tpu_custom_call.1} parent=1 // loop_footer
      %s26 = sadd.s32 1, %s22
    $region7: #{tpu_custom_call.1} parent=1 // loop_footer_branch
      %21 = sbr.rel target = $region3
    $region8: #{tpu_custom_call.1} parent=1 // loop_exit
      _
    %1520 = vsyncpa [#allocation3], 1
    %s1521 = scalar_lea.sflag [#allocation3], 1
    %1522 = vsyncpa %s1521, 1
    %1523 = vsyncpa [#allocation8], 1
    %1524 = vsyncpa [#allocation4], 1
    %s1525 = scalar_lea.sflag [#allocation4], 1
    %1526 = vsyncpa %s1525, 1
    %1527 = vsyncpa [#allocation5], 1
    %s1528 = scalar_lea.sflag [#allocation5], 1
    %1529 = vsyncpa %s1528, 1

</llo_original>
